<compile_context>
chip_gen: v7x
topology: tpu7x:2x2x1
jax: 0.10.0
libtpu: 0.0.40
codegen_flags: <defaults>
</compile_context>

<pallas_src>
import functools

import jax
import jax.numpy as jnp
from jax import lax
from jax.experimental import pallas as pl
from jax.experimental.pallas import tpu as pltpu


# ----------------------------------------------------------------------------
# Kernels
# ----------------------------------------------------------------------------
def _downsample_conv_kernel(xpar_ref, w_ref, b_ref, out_ref):
    """Stride-2 3x3 conv (padding=1): 9 accumulated K=Cin MXU matmuls.

    xpar_ref: (Bt, 4, Hh, Wh, Cin) bf16   parity-split padded input,
              xpar[b, py*2+px, i, j, :] == x_padded[b, 2*i+py, 2*j+px, :]
    w_ref:    (9*Cin, Cout) bf16          rows ordered (dy, dx, cin)
    b_ref:    (1, Cout) f32
    out_ref:  (Bt, Hout, Wout, Cout) f32
    """
    bt = out_ref.shape[0]
    hout, wout, cout = out_ref.shape[1], out_ref.shape[2], out_ref.shape[3]
    cin = xpar_ref.shape[-1]
    m = bt * hout * wout

    acc = jnp.zeros((m, cout), jnp.float32)
    # Each 3x3 tap (dy, dx) is a *contiguous* window of the (dy%2, dx%2) parity
    # grid at static offset (dy//2, dx//2); no strided window reads.
    for dy in range(3):
        py, ay = dy % 2, dy // 2
        for dx in range(3):
            px, ax = dx % 2, dx // 2
            k = dy * 3 + dx
            win = xpar_ref[:, py * 2 + px, ay:ay + hout, ax:ax + wout, :]
            acc = acc + jnp.dot(win.reshape(m, cin),
                                w_ref[k * cin:(k + 1) * cin, :],
                                preferred_element_type=jnp.float32)
    acc = acc + b_ref[...].astype(jnp.float32)
    out_ref[...] = acc.reshape(bt, hout, wout, cout).astype(out_ref.dtype)


def _avg_pool_kernel(x_ref, out_ref):
    """2x2 stride-2 average pool on a lane-packed block.

    x_ref:   (Bt, H, Wout, 2*C) f32  -- column pairs packed into the lane dim
             (free row-major reshape of NHWC done in the wrapper)
    out_ref: (Bt, Hout, Wout, C) f32
    """
    bt, h, wout, c2 = x_ref.shape
    c = c2 // 2
    hout = h // 2

    x = x_ref[...].astype(jnp.float32)
    colsum = x[..., :c] + x[..., c:]                 # lane slice at 128 boundary
    rows = colsum.reshape(bt, hout, 2, wout, c)      # split a *major* dim only
    out_ref[...] = (0.25 * (rows[:, :, 0] + rows[:, :, 1])).astype(out_ref.dtype)


# ----------------------------------------------------------------------------
# Wrappers
# ----------------------------------------------------------------------------
def _pick_bt(b):
    """Largest batch tile that keeps >=2 grid steps (v7x has 2 TensorCores)."""
    if b >= 4 and b % 2 == 0:
        return b // 2
    return 1


def _parity_split(x_nhwc):
    """(B, H, W, C) -> (B, 4, H//2, W//2, C) with index py*2+px = (row%2, col%2)."""
    b, h, w, c = x_nhwc.shape
    assert h % 2 == 0 and w % 2 == 0, "even spatial dims required"
    xr = x_nhwc.reshape(b, h // 2, 2, w // 2, 2, c)
    xr = jnp.transpose(xr, (0, 2, 4, 1, 3, 5))          # (B, py, px, i, j, C)
    return xr.reshape(b, 4, h // 2, w // 2, c)


_COMPILER_PARAMS = pltpu.CompilerParams(
    dimension_semantics=("parallel",),
    # Explicit scoped-VMEM budget: safe on v5e/v6e (128 MiB phys) and within
    # v7x's 64 MiB physical / 32 MiB default.  Per-step usage here is ~3 MiB.
    vmem_limit_bytes=32 * 1024 * 1024,
)


def _downsample_conv(x_nhwc, w_hwio, bias):
    b, h, w, cin = x_nhwc.shape
    cout = w_hwio.shape[-1]
    assert h % 2 == 0 and w % 2 == 0
    hout, wout = h // 2, w // 2
    bt = _pick_bt(b)
    assert b % bt == 0

    # Pad once in the wrapper (no in-kernel zero fills), parity-split so every
    # stride-2 tap is a contiguous window, and cast to bf16 so both the
    # materialized intermediate and the kernel's input DMA are half-width.
    xp = jnp.pad(x_nhwc, ((0, 0), (1, 1), (1, 1), (0, 0)))
    xpar = _parity_split(xp).astype(jnp.bfloat16)        # (B, 4, Hh, Wh, Cin)
    hh, wh = xpar.shape[2], xpar.shape[3]

    w_mat = w_hwio.reshape(9 * cin, cout).astype(jnp.bfloat16)   # rows = (dy,dx,cin)
    b_row = bias.reshape(1, cout).astype(jnp.float32)

    return pl.pallas_call(
        _downsample_conv_kernel,
        out_shape=jax.ShapeDtypeStruct((b, hout, wout, cout), jnp.float32),
        grid_spec=pltpu.PrefetchScalarGridSpec(
            num_scalar_prefetch=0,
            grid=(b // bt,),
            in_specs=[
                pl.BlockSpec((bt, 4, hh, wh, cin), lambda i: (i, 0, 0, 0, 0)),
                pl.BlockSpec((9 * cin, cout), lambda i: (0, 0)),
                pl.BlockSpec((1, cout), lambda i: (0, 0)),
            ],
            out_specs=pl.BlockSpec((bt, hout, wout, cout),
                                   lambda i: (i, 0, 0, 0)),
        ),
        compiler_params=_COMPILER_PARAMS,
    )(xpar, w_mat, b_row)


def _downsample_avgpool(x_nhwc):
    b, h, w, c = x_nhwc.shape
    assert h % 2 == 0 and w % 2 == 0
    hout, wout = h // 2, w // 2
    bt = _pick_bt(b)
    assert b % bt == 0

    # Free (row-major-preserving) reshape: column pairs move into the lane dim.
    xw = x_nhwc.reshape(b, h, wout, 2 * c)

    return pl.pallas_call(
        _avg_pool_kernel,
        out_shape=jax.ShapeDtypeStruct((b, hout, wout, c), jnp.float32),
        grid_spec=pltpu.PrefetchScalarGridSpec(
            num_scalar_prefetch=0,
            grid=(b // bt,),
            in_specs=[pl.BlockSpec((bt, h, wout, 2 * c),
                                   lambda i: (i, 0, 0, 0))],
            out_specs=pl.BlockSpec((bt, hout, wout, c), lambda i: (i, 0, 0, 0)),
        ),
        compiler_params=_COMPILER_PARAMS,
    )(xw)


@functools.partial(jax.jit, static_argnames=("use_conv",))
def downsample_block(x_nchw, w_oihw, bias, use_conv=True):
    """DownSampleBlock.forward. x: (B, C, H, W) f32, weight: (C, C, 3, 3) OIHW."""
    # TODO(synk): in a full NHWC model these boundary transposes disappear.
    x = jnp.transpose(x_nchw, (0, 2, 3, 1))              # NCHW -> NHWC
    if use_conv:
        w_hwio = jnp.transpose(w_oihw, (2, 3, 1, 0))     # OIHW -> HWIO
        y = _downsample_conv(x, w_hwio, bias)
    else:
        y = _downsample_avgpool(x)
    return jnp.transpose(y, (0, 3, 1, 2))                # NHWC -> NCHW


# ----------------------------------------------------------------------------
# Pure-JAX references (exact PyTorch semantics, f32)
# ----------------------------------------------------------------------------
def ref_forward(x_nchw, w_oihw, bias, use_conv=True):
    if use_conv:
        y = lax.conv_general_dilated(
            x_nchw, w_oihw, window_strides=(2, 2), padding=((1, 1), (1, 1)),
            dimension_numbers=("NCHW", "OIHW", "NCHW"))
        return y + bias.reshape(1, -1, 1, 1)
    b, c, h, w = x_nchw.shape
    return x_nchw.reshape(b, c, h // 2, 2, w // 2, 2).mean(axis=(3, 5))


# ----------------------------------------------------------------------------
# Demo / correctness check
# ----------------------------------------------------------------------------
if __name__ == "__main__":
    B, C, H, W = 4, 128, 16, 16                          # input_channels = 128

    key = jax.random.PRNGKey(0)
    kx, kw, kb = jax.random.split(key, 3)
    x = jax.random.normal(kx, (B, C, H, W), jnp.float32)
    w_oihw = jax.random.normal(kw, (C, C, 3, 3), jnp.float32) * (1.0 / (3.0 * C ** 0.5))
    bias = jax.random.normal(kb, (C,), jnp.float32) * 0.02

    # use_conv=True path (module default): stride-2 3x3 conv.
    out = jax.block_until_ready(downsample_block(x, w_oihw, bias, use_conv=True))
    ref = jax.block_until_ready(ref_forward(x, w_oihw, bias, use_conv=True))
    assert out.shape == (B, C, H // 2, W // 2), out.shape
    # bf16 MXU operands/activations vs. f32 reference -> bf16-sized tolerance.
    if not bool(jnp.allclose(out, ref, atol=2e-2, rtol=2e-2)):
        max_err = float(jnp.max(jnp.abs(out - ref)))
        raise AssertionError(f"conv path mismatch, max abs err = {max_err}")

    # use_conv=False path: 2x2 average pool (exact f32 math).
    out_p = jax.block_until_ready(downsample_block(x, w_oihw, bias, use_conv=False))
    ref_p = jax.block_until_ready(ref_forward(x, w_oihw, bias, use_conv=False))
    assert out_p.shape == (B, C, H // 2, W // 2), out_p.shape
    if not bool(jnp.allclose(out_p, ref_p, atol=1e-5, rtol=1e-5)):
        max_err = float(jnp.max(jnp.abs(out_p - ref_p)))
        raise AssertionError(f"avgpool path mismatch, max abs err = {max_err}")

    print("KERNEL_OK")
</pallas_src>

<mosaic_0001>
module attributes {stable_mosaic.version = 11 : i64} {
  func.func @_downsample_conv_kernel(%arg0: i32, %arg1: memref<2x4x9x9x128xbf16, #tpu.memory_space<vmem>>, %arg2: memref<1152x128xbf16, #tpu.memory_space<vmem>>, %arg3: memref<1x128xf32, #tpu.memory_space<vmem>>, %arg4: memref<2x8x8x128xf32, #tpu.memory_space<vmem>>) attributes {dimension_semantics = [#tpu.dimension_semantics<parallel>], iteration_bounds = array<i64: 2>, scalar_prefetch = 0 : i64, scratch_operands = 0 : i64, tpu.core_type = #tpu.core_type<tc>, window_params = [{transform_indices = @transform_0, window_bounds = array<i64: 2, 4, 9, 9, 128>}, {pipeline_mode = #tpu.pipeline_mode<synchronous>, transform_indices = @transform_1, window_bounds = array<i64: 1152, 128>}, {pipeline_mode = #tpu.pipeline_mode<synchronous>, transform_indices = @transform_2, window_bounds = array<i64: 1, 128>}, {transform_indices = @transform_3, window_bounds = array<i64: 2, 8, 8, 128>}]} {
    %cst = arith.constant 0.000000e+00 : f32
    %0 = vector.broadcast %cst : f32 to vector<128x128xf32>
    %c0 = arith.constant 0 : index
    %c0_0 = arith.constant 0 : index
    %c0_1 = arith.constant 0 : index
    %c0_2 = arith.constant 0 : index
    %c0_3 = arith.constant 0 : index
    %1 = vector.load %arg1[%c0, %c0_0, %c0_1, %c0_2, %c0_3] : memref<2x4x9x9x128xbf16, #tpu.memory_space<vmem>>, vector<2x1x8x8x128xbf16>
    %2 = vector.shape_cast %1 : vector<2x1x8x8x128xbf16> to vector<2x8x8x128xbf16>
    %3 = vector.shape_cast %2 : vector<2x8x8x128xbf16> to vector<128x128xbf16>
    %c0_4 = arith.constant 0 : index
    %c0_5 = arith.constant 0 : index
    %4 = vector.load %arg2[%c0_4, %c0_5] : memref<1152x128xbf16, #tpu.memory_space<vmem>>, vector<128x128xbf16>
    %cst_6 = arith.constant dense<0.000000e+00> : vector<128x128xf32>
    %5 = tpu.matmul %3, %4, %cst_6 {dimension_numbers = #tpu.dot_dimension_numbers<[1], [0], [0], [1], [0, 0, 1, 1], [], []>} : vector<128x128xbf16>, vector<128x128xbf16>, vector<128x128xf32> -> vector<128x128xf32>
    %6 = arith.addf %0, %5 : vector<128x128xf32>
    %c0_7 = arith.constant 0 : index
    %c1 = arith.constant 1 : index
    %c0_8 = arith.constant 0 : index
    %c0_9 = arith.constant 0 : index
    %c0_10 = arith.constant 0 : index
    %7 = vector.load %arg1[%c0_7, %c1, %c0_8, %c0_9, %c0_10] : memref<2x4x9x9x128xbf16, #tpu.memory_space<vmem>>, vector<2x1x8x8x128xbf16>
    %8 = vector.shape_cast %7 : vector<2x1x8x8x128xbf16> to vector<2x8x8x128xbf16>
    %9 = vector.shape_cast %8 : vector<2x8x8x128xbf16> to vector<128x128xbf16>
    %c128 = arith.constant 128 : index
    %c0_11 = arith.constant 0 : index
    %10 = vector.load %arg2[%c128, %c0_11] : memref<1152x128xbf16, #tpu.memory_space<vmem>>, vector<128x128xbf16>
    %cst_12 = arith.constant dense<0.000000e+00> : vector<128x128xf32>
    %11 = tpu.matmul %9, %10, %cst_12 {dimension_numbers = #tpu.dot_dimension_numbers<[1], [0], [0], [1], [0, 0, 1, 1], [], []>} : vector<128x128xbf16>, vector<128x128xbf16>, vector<128x128xf32> -> vector<128x128xf32>
    %12 = arith.addf %6, %11 : vector<128x128xf32>
    %c0_13 = arith.constant 0 : index
    %c0_14 = arith.constant 0 : index
    %c0_15 = arith.constant 0 : index
    %c1_16 = arith.constant 1 : index
    %c0_17 = arith.constant 0 : index
    %13 = vector.load %arg1[%c0_13, %c0_14, %c0_15, %c1_16, %c0_17] : memref<2x4x9x9x128xbf16, #tpu.memory_space<vmem>>, vector<2x1x8x8x128xbf16>
    %14 = vector.shape_cast %13 : vector<2x1x8x8x128xbf16> to vector<2x8x8x128xbf16>
    %15 = vector.shape_cast %14 : vector<2x8x8x128xbf16> to vector<128x128xbf16>
    %c256 = arith.constant 256 : index
    %c0_18 = arith.constant 0 : index
    %16 = vector.load %arg2[%c256, %c0_18] : memref<1152x128xbf16, #tpu.memory_space<vmem>>, vector<128x128xbf16>
    %cst_19 = arith.constant dense<0.000000e+00> : vector<128x128xf32>
    %17 = tpu.matmul %15, %16, %cst_19 {dimension_numbers = #tpu.dot_dimension_numbers<[1], [0], [0], [1], [0, 0, 1, 1], [], []>} : vector<128x128xbf16>, vector<128x128xbf16>, vector<128x128xf32> -> vector<128x128xf32>
    %18 = arith.addf %12, %17 : vector<128x128xf32>
    %c0_20 = arith.constant 0 : index
    %c2 = arith.constant 2 : index
    %c0_21 = arith.constant 0 : index
    %c0_22 = arith.constant 0 : index
    %c0_23 = arith.constant 0 : index
    %19 = vector.load %arg1[%c0_20, %c2, %c0_21, %c0_22, %c0_23] : memref<2x4x9x9x128xbf16, #tpu.memory_space<vmem>>, vector<2x1x8x8x128xbf16>
    %20 = vector.shape_cast %19 : vector<2x1x8x8x128xbf16> to vector<2x8x8x128xbf16>
    %21 = vector.shape_cast %20 : vector<2x8x8x128xbf16> to vector<128x128xbf16>
    %c384 = arith.constant 384 : index
    %c0_24 = arith.constant 0 : index
    %22 = vector.load %arg2[%c384, %c0_24] : memref<1152x128xbf16, #tpu.memory_space<vmem>>, vector<128x128xbf16>
    %cst_25 = arith.constant dense<0.000000e+00> : vector<128x128xf32>
    %23 = tpu.matmul %21, %22, %cst_25 {dimension_numbers = #tpu.dot_dimension_numbers<[1], [0], [0], [1], [0, 0, 1, 1], [], []>} : vector<128x128xbf16>, vector<128x128xbf16>, vector<128x128xf32> -> vector<128x128xf32>
    %24 = arith.addf %18, %23 : vector<128x128xf32>
    %c0_26 = arith.constant 0 : index
    %c3 = arith.constant 3 : index
    %c0_27 = arith.constant 0 : index
    %c0_28 = arith.constant 0 : index
    %c0_29 = arith.constant 0 : index
    %25 = vector.load %arg1[%c0_26, %c3, %c0_27, %c0_28, %c0_29] : memref<2x4x9x9x128xbf16, #tpu.memory_space<vmem>>, vector<2x1x8x8x128xbf16>
    %26 = vector.shape_cast %25 : vector<2x1x8x8x128xbf16> to vector<2x8x8x128xbf16>
    %27 = vector.shape_cast %26 : vector<2x8x8x128xbf16> to vector<128x128xbf16>
    %c512 = arith.constant 512 : index
    %c0_30 = arith.constant 0 : index
    %28 = vector.load %arg2[%c512, %c0_30] : memref<1152x128xbf16, #tpu.memory_space<vmem>>, vector<128x128xbf16>
    %cst_31 = arith.constant dense<0.000000e+00> : vector<128x128xf32>
    %29 = tpu.matmul %27, %28, %cst_31 {dimension_numbers = #tpu.dot_dimension_numbers<[1], [0], [0], [1], [0, 0, 1, 1], [], []>} : vector<128x128xbf16>, vector<128x128xbf16>, vector<128x128xf32> -> vector<128x128xf32>
    %30 = arith.addf %24, %29 : vector<128x128xf32>
    %c0_32 = arith.constant 0 : index
    %c2_33 = arith.constant 2 : index
    %c0_34 = arith.constant 0 : index
    %c1_35 = arith.constant 1 : index
    %c0_36 = arith.constant 0 : index
    %31 = vector.load %arg1[%c0_32, %c2_33, %c0_34, %c1_35, %c0_36] : memref<2x4x9x9x128xbf16, #tpu.memory_space<vmem>>, vector<2x1x8x8x128xbf16>
    %32 = vector.shape_cast %31 : vector<2x1x8x8x128xbf16> to vector<2x8x8x128xbf16>
    %33 = vector.shape_cast %32 : vector<2x8x8x128xbf16> to vector<128x128xbf16>
    %c640 = arith.constant 640 : index
    %c0_37 = arith.constant 0 : index
    %34 = vector.load %arg2[%c640, %c0_37] : memref<1152x128xbf16, #tpu.memory_space<vmem>>, vector<128x128xbf16>
    %cst_38 = arith.constant dense<0.000000e+00> : vector<128x128xf32>
    %35 = tpu.matmul %33, %34, %cst_38 {dimension_numbers = #tpu.dot_dimension_numbers<[1], [0], [0], [1], [0, 0, 1, 1], [], []>} : vector<128x128xbf16>, vector<128x128xbf16>, vector<128x128xf32> -> vector<128x128xf32>
    %36 = arith.addf %30, %35 : vector<128x128xf32>
    %c0_39 = arith.constant 0 : index
    %c0_40 = arith.constant 0 : index
    %c1_41 = arith.constant 1 : index
    %c0_42 = arith.constant 0 : index
    %c0_43 = arith.constant 0 : index
    %37 = vector.load %arg1[%c0_39, %c0_40, %c1_41, %c0_42, %c0_43] : memref<2x4x9x9x128xbf16, #tpu.memory_space<vmem>>, vector<2x1x8x8x128xbf16>
    %38 = vector.shape_cast %37 : vector<2x1x8x8x128xbf16> to vector<2x8x8x128xbf16>
    %39 = vector.shape_cast %38 : vector<2x8x8x128xbf16> to vector<128x128xbf16>
    %c768 = arith.constant 768 : index
    %c0_44 = arith.constant 0 : index
    %40 = vector.load %arg2[%c768, %c0_44] : memref<1152x128xbf16, #tpu.memory_space<vmem>>, vector<128x128xbf16>
    %cst_45 = arith.constant dense<0.000000e+00> : vector<128x128xf32>
    %41 = tpu.matmul %39, %40, %cst_45 {dimension_numbers = #tpu.dot_dimension_numbers<[1], [0], [0], [1], [0, 0, 1, 1], [], []>} : vector<128x128xbf16>, vector<128x128xbf16>, vector<128x128xf32> -> vector<128x128xf32>
    %42 = arith.addf %36, %41 : vector<128x128xf32>
    %c0_46 = arith.constant 0 : index
    %c1_47 = arith.constant 1 : index
    %c1_48 = arith.constant 1 : index
    %c0_49 = arith.constant 0 : index
    %c0_50 = arith.constant 0 : index
    %43 = vector.load %arg1[%c0_46, %c1_47, %c1_48, %c0_49, %c0_50] : memref<2x4x9x9x128xbf16, #tpu.memory_space<vmem>>, vector<2x1x8x8x128xbf16>
    %44 = vector.shape_cast %43 : vector<2x1x8x8x128xbf16> to vector<2x8x8x128xbf16>
    %45 = vector.shape_cast %44 : vector<2x8x8x128xbf16> to vector<128x128xbf16>
    %c896 = arith.constant 896 : index
    %c0_51 = arith.constant 0 : index
    %46 = vector.load %arg2[%c896, %c0_51] : memref<1152x128xbf16, #tpu.memory_space<vmem>>, vector<128x128xbf16>
    %cst_52 = arith.constant dense<0.000000e+00> : vector<128x128xf32>
    %47 = tpu.matmul %45, %46, %cst_52 {dimension_numbers = #tpu.dot_dimension_numbers<[1], [0], [0], [1], [0, 0, 1, 1], [], []>} : vector<128x128xbf16>, vector<128x128xbf16>, vector<128x128xf32> -> vector<128x128xf32>
    %48 = arith.addf %42, %47 : vector<128x128xf32>
    %c0_53 = arith.constant 0 : index
    %c0_54 = arith.constant 0 : index
    %c1_55 = arith.constant 1 : index
    %c1_56 = arith.constant 1 : index
    %c0_57 = arith.constant 0 : index
    %49 = vector.load %arg1[%c0_53, %c0_54, %c1_55, %c1_56, %c0_57] : memref<2x4x9x9x128xbf16, #tpu.memory_space<vmem>>, vector<2x1x8x8x128xbf16>
    %50 = vector.shape_cast %49 : vector<2x1x8x8x128xbf16> to vector<2x8x8x128xbf16>
    %51 = vector.shape_cast %50 : vector<2x8x8x128xbf16> to vector<128x128xbf16>
    %c1024 = arith.constant 1024 : index
    %c0_58 = arith.constant 0 : index
    %52 = vector.load %arg2[%c1024, %c0_58] : memref<1152x128xbf16, #tpu.memory_space<vmem>>, vector<128x128xbf16>
    %cst_59 = arith.constant dense<0.000000e+00> : vector<128x128xf32>
    %53 = tpu.matmul %51, %52, %cst_59 {dimension_numbers = #tpu.dot_dimension_numbers<[1], [0], [0], [1], [0, 0, 1, 1], [], []>} : vector<128x128xbf16>, vector<128x128xbf16>, vector<128x128xf32> -> vector<128x128xf32>
    %54 = arith.addf %48, %53 : vector<128x128xf32>
    %c0_60 = arith.constant 0 : index
    %c0_61 = arith.constant 0 : index
    %55 = vector.load %arg3[%c0_60, %c0_61] : memref<1x128xf32, #tpu.memory_space<vmem>>, vector<1x128xf32>
    %56 = vector.broadcast %55 : vector<1x128xf32> to vector<128x128xf32>
    %57 = arith.addf %54, %56 : vector<128x128xf32>
    %58 = vector.shape_cast %57 : vector<128x128xf32> to vector<2x8x8x128xf32>
    %c0_62 = arith.constant 0 : index
    %c0_63 = arith.constant 0 : index
    %c0_64 = arith.constant 0 : index
    %c0_65 = arith.constant 0 : index
    %59 = vector.load %arg4[%c0_62, %c0_63, %c0_64, %c0_65] : memref<2x8x8x128xf32, #tpu.memory_space<vmem>>, vector<2x8x8x128xf32>
    tpu.vector_store %arg4[%c0_62, %c0_63, %c0_64, %c0_65], %58 {strides = array<i32>} : memref<2x8x8x128xf32, #tpu.memory_space<vmem>>, vector<2x8x8x128xf32>,
    return
  }
  func.func @transform_0(%arg0: i32) -> (i32, i32, i32, i32, i32) {
    %c0_i32 = arith.constant 0 : i32
    %c0_i32_0 = arith.constant 0 : i32
    %c0_i32_1 = arith.constant 0 : i32
    %c0_i32_2 = arith.constant 0 : i32
    %c0_i32_3 = arith.constant 0 : i32
    return %arg0, %c0_i32, %c0_i32_0, %c0_i32_1, %c0_i32_2 : i32, i32, i32, i32, i32
  }
  func.func @transform_1(%arg0: i32) -> (i32, i32) {
    %c0_i32 = arith.constant 0 : i32
    %c0_i32_0 = arith.constant 0 : i32
    %c0_i32_1 = arith.constant 0 : i32
    return %c0_i32, %c0_i32_0 : i32, i32
  }
  func.func @transform_2(%arg0: i32) -> (i32, i32) {
    %c0_i32 = arith.constant 0 : i32
    %c0_i32_0 = arith.constant 0 : i32
    %c0_i32_1 = arith.constant 0 : i32
    return %c0_i32, %c0_i32_0 : i32, i32
  }
  func.func @transform_3(%arg0: i32) -> (i32, i32, i32, i32) {
    %c0_i32 = arith.constant 0 : i32
    %c0_i32_0 = arith.constant 0 : i32
    %c0_i32_1 = arith.constant 0 : i32
    %c0_i32_2 = arith.constant 0 : i32
    return %arg0, %c0_i32, %c0_i32_0, %c0_i32_1 : i32, i32, i32, i32
  }
}

</mosaic_0001>

<llo_original>
// kernel: downsample_block.1
$region0: #{downsample_block.1}
  #allocation0 [shape = 'u32[]', space=smem, size = 0x4, offset = 0x4, fixed_abs, tag = 'smem constant byte address 0x4 - core index']
  #allocation1 [shape = 'u32[144,128]{1,0:T(1,128)}', space=vmem, size = 0x12000, scoped, tag = 'internal scratch']
  %s0 = inlined_call_operand.vmem [shape: bf16[4,4,9,9,128], index: 0, kind: input, shape index: {}]
  %s1 = inlined_call_operand.vmem [shape: bf16[1152,128], index: 1, kind: input, shape index: {}]
  %s2 = inlined_call_operand.vmem [shape: f32[1,128], index: 2, kind: input, shape index: {}]
  %s3 = inlined_call_operand.hbm [shape: f32[4,8,8,128], index: 3, kind: output, shape index: {}]
  %s4 = sld [smem:[#allocation0]]
  $region45: #{downsample_block.1} parent=0
    _
  %s6 = ssub.s32 1, %s4
  %s7 = scalar_select 0, %s6, %s4
  $region1: #{downsample_block.1} parent=0
    #allocation2 [shape = 'u8[131072]{0}', space=vmem, size = 0x20000, scoped, tag = 'output window, operand 0']
    #allocation3 [shape = 's32[2]{0}', space=sflag, size = 0x8, scoped, tag = 'scoped memory for downsample_block.1']
    %8 = vsyncpa [#allocation3], 0
    %s9 = scalar_lea.sflag [#allocation3], 1
    %10 = vsyncpa %s9, 0
    loop: start=0, step=1, limit=4
    $region2: #{downsample_block.1} parent=1 // loop_pre_header
      _
    $region3: #{downsample_block.1} parent=1 // loop_header
      %s12 = sphi 0, %s16
      %p13 = scmp.ge.s32.totalorder %s12, 4
      %s22 = sphi 0, %s24
      %s25 = sphi 0, %s22
      %s26 = sphi 0, %s25
      %s42 = sphi 0, %s26
      %s46 = sphi 0, %s46
      %s48 = sphi 0, %s46
      %s49 = sphi 0, %s48
      %s63 = sphi 0, %s49
      %s67 = sphi 0, %s67
      %s69 = sphi 0, %s67
      %s70 = sphi 0, %s69
      %s84 = sphi 0, %s70
      %s90 = sphi 0, %s92
      %s93 = sphi 0, %s90
      %s94 = sphi 0, %s93
      %s110 = sphi 0, %s94
    $region4: #{downsample_block.1} parent=1 // loop_header_branch
      %15 = sbr.rel (%p13) target = $region8
    $region5: #{downsample_block.1} parent=1 // loop_body
      %s17 = ssub.s32 %s12, 1
      %s18 = ssub.s32 %s12, 2
      %s19 = sadd.s32 %s12, 1
      %s20 = ssub.s32 %s12, %s19
      %p21 = scmp.eq.s32.totalorder %s20, 0
      %s23 = sadd.s32 %s22, 1
      %s24 = scalar_select %p21, %s22, %s23
      %p27 = pneg %p21
      %p28 = scmp.eq.s32.totalorder %s12, 1
      %p29 = por %p27, %p28
      %p30 = scmp.ne.s32.totalorder %s22, %s25
      %p31 = scmp.eq.s32.totalorder %s12, 0
      %p32 = por %p30, %p31
      %p33 = scmp.ne.s32.totalorder %s22, %s25
      %p34 = scmp.eq.s32.totalorder %s17, 1
      %p35 = por %p33, %p34
      %p36 = scmp.ne.s32.totalorder %s25, %s26
      %p37 = scmp.eq.s32.totalorder %s17, 0
      %p38 = por %p36, %p37
      %p39 = scmp.ne.s32.totalorder %s25, %s26
      %p40 = scmp.eq.s32.totalorder %s18, 1
      %p41 = por %p39, %p40
      %p43 = scmp.ne.s32.totalorder %s26, %s42
      %p44 = scmp.eq.s32.totalorder %s18, 0
      %p45 = por %p43, %p44
      %s47 = sadd.s32 %s46, 1
      %p50 = scmp.eq.s32.totalorder %s12, 1
      %p51 = scmp.ne.s32.totalorder %s46, %s48
      %p52 = scmp.eq.s32.totalorder %s12, 0
      %p53 = por %p51, %p52
      %p54 = scmp.ne.s32.totalorder %s46, %s48
      %p55 = scmp.eq.s32.totalorder %s17, 1
      %p56 = por %p54, %p55
      %p57 = scmp.ne.s32.totalorder %s48, %s49
      %p58 = scmp.eq.s32.totalorder %s17, 0
      %p59 = por %p57, %p58
      %p60 = scmp.ne.s32.totalorder %s48, %s49
      %p61 = scmp.eq.s32.totalorder %s18, 1
      %p62 = por %p60, %p61
      %p64 = scmp.ne.s32.totalorder %s49, %s63
      %p65 = scmp.eq.s32.totalorder %s18, 0
      %p66 = por %p64, %p65
      %s68 = sadd.s32 %s67, 1
      %p71 = scmp.eq.s32.totalorder %s12, 1
      %p72 = scmp.ne.s32.totalorder %s67, %s69
      %p73 = scmp.eq.s32.totalorder %s12, 0
      %p74 = por %p72, %p73
      %p75 = scmp.ne.s32.totalorder %s67, %s69
      %p76 = scmp.eq.s32.totalorder %s17, 1
      %p77 = por %p75, %p76
      %p78 = scmp.ne.s32.totalorder %s69, %s70
      %p79 = scmp.eq.s32.totalorder %s17, 0
      %p80 = por %p78, %p79
      %p81 = scmp.ne.s32.totalorder %s69, %s70
      %p82 = scmp.eq.s32.totalorder %s18, 1
      %p83 = por %p81, %p82
      %p85 = scmp.ne.s32.totalorder %s70, %s84
      %p86 = scmp.eq.s32.totalorder %s18, 0
      %p87 = por %p85, %p86
      %s88 = ssub.s32 %s12, %s19
      %p89 = scmp.eq.s32.totalorder %s88, 0
      %s91 = sadd.s32 %s90, 1
      %s92 = scalar_select %p89, %s90, %s91
      %p95 = pneg %p89
      %p96 = scmp.eq.s32.totalorder %s12, 1
      %p97 = por %p95, %p96
      %p98 = scmp.ne.s32.totalorder %s90, %s93
      %p99 = scmp.eq.s32.totalorder %s12, 0
      %p100 = por %p98, %p99
      %p101 = scmp.ne.s32.totalorder %s90, %s93
      %p102 = scmp.eq.s32.totalorder %s17, 1
      %p103 = por %p101, %p102
      %p104 = scmp.ne.s32.totalorder %s93, %s94
      %p105 = scmp.eq.s32.totalorder %s17, 0
      %p106 = por %p104, %p105
      %p107 = scmp.ne.s32.totalorder %s93, %s94
      %p108 = scmp.eq.s32.totalorder %s18, 1
      %p109 = por %p107, %p108
      %p111 = scmp.ne.s32.totalorder %s94, %s110
      %p112 = scmp.eq.s32.totalorder %s18, 0
      %p113 = por %p111, %p112
      %p114 = scmp.le.s32.totalorder 1, %s12
      %p115 = scmp.lt.s32.totalorder %s12, 3
      %p116 = pnand %p114, %p115
      %p117 = pneg %p116
      // Predicated region
      $region9: #{downsample_block.1} parent=5 // pred_check
        _
      $region10: #{downsample_block.1} parent=5 // pred_check_branch
        %119 = sbr.rel (%p116) target = $region12
      $region11: #{downsample_block.1} parent=5 // pred_region
        %s120 = ssub.s32 %s12, 1
        // Predicated region
        $region13: #{downsample_block.1} parent=11 // pred_check
          %p121 = pneg %p59
        $region14: #{downsample_block.1} parent=11 // pred_check_branch
          %123 = sbr.rel (%p121) target = $region16
        $region15: #{downsample_block.1} parent=11 // pred_region
          _
        $region16: #{downsample_block.1} parent=11 // pred_fallthru
          _
        // Predicated region
        $region17: #{downsample_block.1} parent=11 // pred_check
          %p124 = pneg %p80
        $region18: #{downsample_block.1} parent=11 // pred_check_branch
          %126 = sbr.rel (%p124) target = $region20
        $region19: #{downsample_block.1} parent=11 // pred_region
          _
        $region20: #{downsample_block.1} parent=11 // pred_fallthru
          _
      $region12: #{downsample_block.1} parent=5 // pred_fallthru
        _
      %p127 = scmp.lt.s32.totalorder %s12, 2
      // Predicated region
      $region21: #{downsample_block.1} parent=5 // pred_check
        %p128 = pneg %p127
      $region22: #{downsample_block.1} parent=5 // pred_check_branch
        %130 = sbr.rel (%p128) target = $region24
      $region23: #{downsample_block.1} parent=5 // pred_region
        // Predicated region
        $region25: #{downsample_block.1} parent=23 // pred_check
          %p131 = pneg %p32
        $region26: #{downsample_block.1} parent=23 // pred_check_branch
          %133 = sbr.rel (%p131) target = $region28
        $region27: #{downsample_block.1} parent=23 // pred_region
          %s134 = smul.u32 2, %s12
          %p135 = scmp.lt.s32.totalorder %s134, 3
          %s136 = scalar_select %p135, %s134, 3
          %s137 = smul.addr %s136, 72
          %s138 = smul.addr %s137, 4
          %s139 = scalar_lea.vmem %s0, %s138
          %s140 = smul.u32 2, %s12
        $region28: #{downsample_block.1} parent=23 // pred_fallthru
          _
      $region24: #{downsample_block.1} parent=5 // pred_fallthru
        _
      %p141 = scmp.le.s32.totalorder 1, %s12
      %p142 = scmp.lt.s32.totalorder %s12, 3
      %p143 = pnand %p141, %p142
      %p144 = pneg %p143
      // Predicated region
      $region29: #{downsample_block.1} parent=5 // pred_check
        _
      $region30: #{downsample_block.1} parent=5 // pred_check_branch
        %146 = sbr.rel (%p143) target = $region32
      $region31: #{downsample_block.1} parent=5 // pred_region
        %s147 = ssub.s32 %s12, 1
        %s148 = smul.u32 2, %s17
        %p149 = scmp.lt.s32.totalorder %s148, 3
        %s150 = scalar_select %p149, %s148, 3
        %s151 = smul.addr %s150, 72
        %s152 = smul.addr %s151, 4
        %s153 = scalar_lea.vmem %s0, %s152
        %p154 = pneg %p38
        %p155 = pneg %p35
        %p156 = pneg %p59
        %p157 = pneg %p56
        %p158 = pneg %p80
        %p159 = pneg %p77
        %p160 = pneg %p106
        %p161 = pneg %p103
        %s162 = sand.u32 %s93, 1
        %s163 = scalar_lea.sflag [#allocation3], %s162
        %s164 = sand.u32 %s93, 1
        %s165 = smul.addr %s164, 128
        %s166 = scalar_lea.vmem [#allocation2], %s165
        %s167 = smul.u32 2, %s17
        %p168 = scmp.lt.s32.totalorder %s167, 3
        %s169 = scalar_select %p168, %s167, 3
        %s170 = smul.addr %s169, 72
        %s171 = smul.addr %s170, 4
        %s172 = scalar_lea.vmem %s0, %s171
        %s173 = smul.u32 2, %s17
        %s174 = smul.u32 2, %s17
        %v176 = vld [vmem:[%s172] sm:$0xf]
        %v177 = vld [vmem:[%s172 + $0x8] sm:$0xf]
        %v178 = vld [vmem:[%s172 + $0x10] sm:$0xf]
        %v179 = vld [vmem:[%s172 + $0x18] sm:$0xf]
        %v180 = vld [vmem:[%s172 + $0x20] sm:$0xf]
        %v181 = vld [vmem:[%s172 + $0x28] sm:$0xf]
        %v182 = vld [vmem:[%s172 + $0x30] sm:$0xf]
        %v183 = vld [vmem:[%s172 + $0x38] sm:$0xf]
        %v184 = vld [vmem:[%s172 + $0x120] sm:$0xf]
        %v185 = vld [vmem:[%s172 + $0x128] sm:$0xf]
        %v186 = vld [vmem:[%s172 + $0x130] sm:$0xf]
        %v187 = vld [vmem:[%s172 + $0x138] sm:$0xf]
        %v188 = vld [vmem:[%s172 + $0x140] sm:$0xf]
        %v189 = vld [vmem:[%s172 + $0x148] sm:$0xf]
        %v190 = vld [vmem:[%s172 + $0x150] sm:$0xf]
        %v191 = vld [vmem:[%s172 + $0x158] sm:$0xf]
        %v192 = vld [vmem:[%s1] sm:$0xf]
        %v193 = vld [vmem:[%s1 + $0x4] sm:$0xf]
        %v194 = vld [vmem:[%s1 + $0x8] sm:$0xf]
        %v195 = vld [vmem:[%s1 + $0xc] sm:$0xf]
        %v196 = vld [vmem:[%s1 + $0x10] sm:$0xf]
        %v197 = vld [vmem:[%s1 + $0x14] sm:$0xf]
        %v198 = vld [vmem:[%s1 + $0x18] sm:$0xf]
        %v199 = vld [vmem:[%s1 + $0x1c] sm:$0xf]
        %v200 = vld [vmem:[%s1 + $0x20] sm:$0xf]
        %v201 = vld [vmem:[%s1 + $0x24] sm:$0xf]
        %v202 = vld [vmem:[%s1 + $0x28] sm:$0xf]
        %v203 = vld [vmem:[%s1 + $0x2c] sm:$0xf]
        %v204 = vld [vmem:[%s1 + $0x30] sm:$0xf]
        %v205 = vld [vmem:[%s1 + $0x34] sm:$0xf]
        %v206 = vld [vmem:[%s1 + $0x38] sm:$0xf]
        %v207 = vld [vmem:[%s1 + $0x3c] sm:$0xf]
        %s208 = scalar_lea.vmem %s172, 72
        %v209 = vld [vmem:[%s208] sm:$0xf]
        %v210 = vld [vmem:[%s208 + $0x8] sm:$0xf]
        %v211 = vld [vmem:[%s208 + $0x10] sm:$0xf]
        %v212 = vld [vmem:[%s208 + $0x18] sm:$0xf]
        %v213 = vld [vmem:[%s208 + $0x20] sm:$0xf]
        %v214 = vld [vmem:[%s208 + $0x28] sm:$0xf]
        %v215 = vld [vmem:[%s208 + $0x30] sm:$0xf]
        %v216 = vld [vmem:[%s208 + $0x38] sm:$0xf]
        %v217 = vld [vmem:[%s208 + $0x120] sm:$0xf]
        %v218 = vld [vmem:[%s208 + $0x128] sm:$0xf]
        %v219 = vld [vmem:[%s208 + $0x130] sm:$0xf]
        %v220 = vld [vmem:[%s208 + $0x138] sm:$0xf]
        %v221 = vld [vmem:[%s208 + $0x140] sm:$0xf]
        %v222 = vld [vmem:[%s208 + $0x148] sm:$0xf]
        %v223 = vld [vmem:[%s208 + $0x150] sm:$0xf]
        %v224 = vld [vmem:[%s208 + $0x158] sm:$0xf]
        %v225 = vld [vmem:[%s1 + $0x40] sm:$0xf]
        %v226 = vld [vmem:[%s1 + $0x44] sm:$0xf]
        %v227 = vld [vmem:[%s1 + $0x48] sm:$0xf]
        %v228 = vld [vmem:[%s1 + $0x4c] sm:$0xf]
        %v229 = vld [vmem:[%s1 + $0x50] sm:$0xf]
        %v230 = vld [vmem:[%s1 + $0x54] sm:$0xf]
        %v231 = vld [vmem:[%s1 + $0x58] sm:$0xf]
        %v232 = vld [vmem:[%s1 + $0x5c] sm:$0xf]
        %v233 = vld [vmem:[%s1 + $0x60] sm:$0xf]
        %v234 = vld [vmem:[%s1 + $0x64] sm:$0xf]
        %v235 = vld [vmem:[%s1 + $0x68] sm:$0xf]
        %v236 = vld [vmem:[%s1 + $0x6c] sm:$0xf]
        %v237 = vld [vmem:[%s1 + $0x70] sm:$0xf]
        %v238 = vld [vmem:[%s1 + $0x74] sm:$0xf]
        %v239 = vld [vmem:[%s1 + $0x78] sm:$0xf]
        %v240 = vld [vmem:[%s1 + $0x7c] sm:$0xf]
        %v257 = vunpack.c.l.b16 %v209
        %v258 = vunpack.c.l.b16 %v210
        %v259 = vunpack.c.l.b16 %v211
        %v260 = vunpack.c.l.b16 %v212
        %v261 = vunpack.c.l.b16 %v213
        %v262 = vunpack.c.l.b16 %v214
        %v263 = vunpack.c.l.b16 %v215
        %v264 = vunpack.c.l.b16 %v216
        %v265 = vunpack.c.l.b16 %v217
        %v266 = vunpack.c.l.b16 %v218
        %v267 = vunpack.c.l.b16 %v219
        %v268 = vunpack.c.l.b16 %v220
        %v269 = vunpack.c.l.b16 %v221
        %v270 = vunpack.c.l.b16 %v222
        %v271 = vunpack.c.l.b16 %v223
        %v272 = vunpack.c.l.b16 %v224
        %v273 = vpack.c.b16 %v258, %v257
        %v274 = vpack.c.b16 %v260, %v259
        %v275 = vpack.c.b16 %v262, %v261
        %v276 = vpack.c.b16 %v264, %v263
        %v277 = vpack.c.b16 %v266, %v265
        %v278 = vpack.c.b16 %v268, %v267
        %v279 = vpack.c.b16 %v270, %v269
        %v280 = vpack.c.b16 %v272, %v271
        %v305 = vunpack.c.l.b16 %v225
        %v306 = vunpack.c.l.b16 %v226
        %v307 = vunpack.c.l.b16 %v227
        %v308 = vunpack.c.l.b16 %v228
        %v309 = vunpack.c.l.b16 %v229
        %v310 = vunpack.c.l.b16 %v230
        %v311 = vunpack.c.l.b16 %v231
        %v312 = vunpack.c.l.b16 %v232
        %v313 = vunpack.c.l.b16 %v233
        %v314 = vunpack.c.l.b16 %v234
        %v315 = vunpack.c.l.b16 %v235
        %v316 = vunpack.c.l.b16 %v236
        %v317 = vunpack.c.l.b16 %v237
        %v318 = vunpack.c.l.b16 %v238
        %v319 = vunpack.c.l.b16 %v239
        %v320 = vunpack.c.l.b16 %v240
        %v321 = vpack.c.b16 %v306, %v305
        %v322 = vpack.c.b16 %v308, %v307
        %v323 = vpack.c.b16 %v310, %v309
        %v324 = vpack.c.b16 %v312, %v311
        %v325 = vpack.c.b16 %v314, %v313
        %v326 = vpack.c.b16 %v316, %v315
        %v327 = vpack.c.b16 %v318, %v317
        %v328 = vpack.c.b16 %v320, %v319
        %337 = vmatprep.subr.bf16.mxu0 0
        %338 = vmatpush1.bf16.msra.mxu0 %v321
        %339 = vmatprep.subr.bf16.mxu0 0
        %340 = vmatpush1.bf16.msra.mxu0 %v322
        %341 = vmatprep.subr.bf16.mxu0 0
        %342 = vmatpush1.bf16.msra.mxu0 %v323
        %343 = vmatprep.subr.bf16.mxu0 0
        %344 = vmatpush1.bf16.msra.mxu0 %v324
        %345 = vmatprep.subr.bf16.mxu0 0
        %346 = vmatpush1.bf16.msra.mxu0 %v325
        %347 = vmatprep.subr.bf16.mxu0 0
        %348 = vmatpush1.bf16.msra.mxu0 %v326
        %349 = vmatprep.subr.bf16.mxu0 0
        %350 = vmatpush1.bf16.msra.mxu0 %v327
        %351 = vmatprep.subr.bf16.mxu0 0
        %352 = vmatpush1.bf16.msra.mxu0 %v328
        %353 = vmatprep.subr.bf16.mxu0 0
        %354 = vmatpush1.bf16.msra.mxu0 0
        %355 = vmatprep.subr.bf16.mxu0 0
        %356 = vmatpush1.bf16.msra.mxu0 0
        %357 = vmatprep.subr.bf16.mxu0 0
        %358 = vmatpush1.bf16.msra.mxu0 0
        %359 = vmatprep.subr.bf16.mxu0 0
        %360 = vmatpush1.bf16.msra.mxu0 0
        %361 = vmatprep.subr.bf16.mxu0 0
        %362 = vmatpush1.bf16.msra.mxu0 0
        %363 = vmatprep.subr.bf16.mxu0 0
        %364 = vmatpush1.bf16.msra.mxu0 0
        %365 = vmatprep.subr.bf16.mxu0 0
        %366 = vmatpush1.bf16.msra.mxu0 0
        %367 = vmatprep.subr.bf16.mxu0 0
        %368 = vmatpush1.bf16.msra.mxu0 0
        %369 = vmatprep.mubr.bf16.mxu0 0
        %370 = vmatmul.mubr.bf16.gmra.mrb[0].mxu0 %v273
        %v371 = vpop.f32.mrb[0].mxu0
        %v372 = vadd.f32 0.0, %v371
        %v373 = vpop.f32.mrb[0].mxu0
        %v374 = vpop.f32.mrb[0].mxu0
        %v375 = vadd.f32 0.0, %v374
        %v376 = vpop.f32.mrb[0].mxu0
        %377 = vmatprep.mubr.bf16.mxu0 0
        %378 = vmatmul.mubr.bf16.gmra.mrb[0].mxu0 %v274
        %v379 = vpop.f32.mrb[0].mxu0
        %v380 = vadd.f32 0.0, %v379
        %v381 = vpop.f32.mrb[0].mxu0
        %v382 = vpop.f32.mrb[0].mxu0
        %v383 = vadd.f32 0.0, %v382
        %v384 = vpop.f32.mrb[0].mxu0
        %385 = vmatprep.mubr.bf16.mxu0 0
        %386 = vmatmul.mubr.bf16.gmra.mrb[0].mxu0 %v275
        %v387 = vpop.f32.mrb[0].mxu0
        %v388 = vadd.f32 0.0, %v387
        %v389 = vpop.f32.mrb[0].mxu0
        %v390 = vpop.f32.mrb[0].mxu0
        %v391 = vadd.f32 0.0, %v390
        %v392 = vpop.f32.mrb[0].mxu0
        %393 = vmatprep.mubr.bf16.mxu0 0
        %394 = vmatmul.mubr.bf16.gmra.mrb[0].mxu0 %v276
        %v395 = vpop.f32.mrb[0].mxu0
        %v396 = vadd.f32 0.0, %v395
        %v397 = vpop.f32.mrb[0].mxu0
        %v398 = vpop.f32.mrb[0].mxu0
        %v399 = vadd.f32 0.0, %v398
        %v400 = vpop.f32.mrb[0].mxu0
        %401 = vmatprep.mubr.bf16.mxu0 0
        %402 = vmatmul.mubr.bf16.gmra.mrb[0].mxu0 %v277
        %v403 = vpop.f32.mrb[0].mxu0
        %v404 = vadd.f32 0.0, %v403
        %v405 = vpop.f32.mrb[0].mxu0
        %v406 = vpop.f32.mrb[0].mxu0
        %v407 = vadd.f32 0.0, %v406
        %v408 = vpop.f32.mrb[0].mxu0
        %409 = vmatprep.mubr.bf16.mxu0 0
        %410 = vmatmul.mubr.bf16.gmra.mrb[0].mxu0 %v278
        %v411 = vpop.f32.mrb[0].mxu0
        %v412 = vadd.f32 0.0, %v411
        %v413 = vpop.f32.mrb[0].mxu0
        %v414 = vpop.f32.mrb[0].mxu0
        %v415 = vadd.f32 0.0, %v414
        %v416 = vpop.f32.mrb[0].mxu0
        %417 = vmatprep.mubr.bf16.mxu0 0
        %418 = vmatmul.mubr.bf16.gmra.mrb[0].mxu0 %v279
        %v419 = vpop.f32.mrb[0].mxu0
        %v420 = vadd.f32 0.0, %v419
        %v421 = vpop.f32.mrb[0].mxu0
        %v422 = vpop.f32.mrb[0].mxu0
        %v423 = vadd.f32 0.0, %v422
        %v424 = vpop.f32.mrb[0].mxu0
        %425 = vmatprep.mubr.bf16.mxu0 0
        %426 = vmatmul.mubr.bf16.gmra.mrb[0].mxu0 %v280
        %v427 = vpop.f32.mrb[0].mxu0
        %v428 = vadd.f32 0.0, %v427
        %v429 = vpop.f32.mrb[0].mxu0
        %v430 = vpop.f32.mrb[0].mxu0
        %v431 = vadd.f32 0.0, %v430
        %v432 = vpop.f32.mrb[0].mxu0
        %433 = vdwg.mxu0
        %v450 = vunpack.c.l.b16 %v176
        %v451 = vunpack.c.l.b16 %v177
        %v452 = vunpack.c.l.b16 %v178
        %v453 = vunpack.c.l.b16 %v179
        %v454 = vunpack.c.l.b16 %v180
        %v455 = vunpack.c.l.b16 %v181
        %v456 = vunpack.c.l.b16 %v182
        %v457 = vunpack.c.l.b16 %v183
        %v458 = vunpack.c.l.b16 %v184
        %v459 = vunpack.c.l.b16 %v185
        %v460 = vunpack.c.l.b16 %v186
        %v461 = vunpack.c.l.b16 %v187
        %v462 = vunpack.c.l.b16 %v188
        %v463 = vunpack.c.l.b16 %v189
        %v464 = vunpack.c.l.b16 %v190
        %v465 = vunpack.c.l.b16 %v191
        %v466 = vpack.c.b16 %v451, %v450
        %v467 = vpack.c.b16 %v453, %v452
        %v468 = vpack.c.b16 %v455, %v454
        %v469 = vpack.c.b16 %v457, %v456
        %v470 = vpack.c.b16 %v459, %v458
        %v471 = vpack.c.b16 %v461, %v460
        %v472 = vpack.c.b16 %v463, %v462
        %v473 = vpack.c.b16 %v465, %v464
        %v498 = vunpack.c.l.b16 %v192
        %v499 = vunpack.c.l.b16 %v193
        %v500 = vunpack.c.l.b16 %v194
        %v501 = vunpack.c.l.b16 %v195
        %v502 = vunpack.c.l.b16 %v196
        %v503 = vunpack.c.l.b16 %v197
        %v504 = vunpack.c.l.b16 %v198
        %v505 = vunpack.c.l.b16 %v199
        %v506 = vunpack.c.l.b16 %v200
        %v507 = vunpack.c.l.b16 %v201
        %v508 = vunpack.c.l.b16 %v202
        %v509 = vunpack.c.l.b16 %v203
        %v510 = vunpack.c.l.b16 %v204
        %v511 = vunpack.c.l.b16 %v205
        %v512 = vunpack.c.l.b16 %v206
        %v513 = vunpack.c.l.b16 %v207
        %v514 = vpack.c.b16 %v499, %v498
        %v515 = vpack.c.b16 %v501, %v500
        %v516 = vpack.c.b16 %v503, %v502
        %v517 = vpack.c.b16 %v505, %v504
        %v518 = vpack.c.b16 %v507, %v506
        %v519 = vpack.c.b16 %v509, %v508
        %v520 = vpack.c.b16 %v511, %v510
        %v521 = vpack.c.b16 %v513, %v512
        %530 = vmatprep.subr.bf16.mxu0 0
        %531 = vmatpush1.bf16.msra.mxu0 %v514
        %532 = vmatprep.subr.bf16.mxu0 0
        %533 = vmatpush1.bf16.msra.mxu0 %v515
        %534 = vmatprep.subr.bf16.mxu0 0
        %535 = vmatpush1.bf16.msra.mxu0 %v516
        %536 = vmatprep.subr.bf16.mxu0 0
        %537 = vmatpush1.bf16.msra.mxu0 %v517
        %538 = vmatprep.subr.bf16.mxu0 0
        %539 = vmatpush1.bf16.msra.mxu0 %v518
        %540 = vmatprep.subr.bf16.mxu0 0
        %541 = vmatpush1.bf16.msra.mxu0 %v519
        %542 = vmatprep.subr.bf16.mxu0 0
        %543 = vmatpush1.bf16.msra.mxu0 %v520
        %544 = vmatprep.subr.bf16.mxu0 0
        %545 = vmatpush1.bf16.msra.mxu0 %v521
        %546 = vmatprep.subr.bf16.mxu0 0
        %547 = vmatpush1.bf16.msra.mxu0 0
        %548 = vmatprep.subr.bf16.mxu0 0
        %549 = vmatpush1.bf16.msra.mxu0 0
        %550 = vmatprep.subr.bf16.mxu0 0
        %551 = vmatpush1.bf16.msra.mxu0 0
        %552 = vmatprep.subr.bf16.mxu0 0
        %553 = vmatpush1.bf16.msra.mxu0 0
        %554 = vmatprep.subr.bf16.mxu0 0
        %555 = vmatpush1.bf16.msra.mxu0 0
        %556 = vmatprep.subr.bf16.mxu0 0
        %557 = vmatpush1.bf16.msra.mxu0 0
        %558 = vmatprep.subr.bf16.mxu0 0
        %559 = vmatpush1.bf16.msra.mxu0 0
        %560 = vmatprep.subr.bf16.mxu0 0
        %561 = vmatpush1.bf16.msra.mxu0 0
        %562 = vmatprep.mubr.bf16.mxu0 0
        %563 = vmatmul.mubr.bf16.gmra.mrb[0].mxu0 %v466
        %v564 = vpop.f32.mrb[0].mxu0
        %v565 = vadd.f32 %v372, %v564
        %v566 = vpop.f32.mrb[0].mxu0
        %v567 = vpop.f32.mrb[0].mxu0
        %v568 = vadd.f32 %v375, %v567
        %v569 = vpop.f32.mrb[0].mxu0
        %570 = vmatprep.mubr.bf16.mxu0 0
        %571 = vmatmul.mubr.bf16.gmra.mrb[0].mxu0 %v467
        %v572 = vpop.f32.mrb[0].mxu0
        %v573 = vadd.f32 %v380, %v572
        %v574 = vpop.f32.mrb[0].mxu0
        %v575 = vpop.f32.mrb[0].mxu0
        %v576 = vadd.f32 %v383, %v575
        %v577 = vpop.f32.mrb[0].mxu0
        %578 = vmatprep.mubr.bf16.mxu0 0
        %579 = vmatmul.mubr.bf16.gmra.mrb[0].mxu0 %v468
        %v580 = vpop.f32.mrb[0].mxu0
        %v581 = vadd.f32 %v388, %v580
        %v582 = vpop.f32.mrb[0].mxu0
        %v583 = vpop.f32.mrb[0].mxu0
        %v584 = vadd.f32 %v391, %v583
        %v585 = vpop.f32.mrb[0].mxu0
        %586 = vmatprep.mubr.bf16.mxu0 0
        %587 = vmatmul.mubr.bf16.gmra.mrb[0].mxu0 %v469
        %v588 = vpop.f32.mrb[0].mxu0
        %v589 = vadd.f32 %v396, %v588
        %v590 = vpop.f32.mrb[0].mxu0
        %v591 = vpop.f32.mrb[0].mxu0
        %v592 = vadd.f32 %v399, %v591
        %v593 = vpop.f32.mrb[0].mxu0
        %594 = vmatprep.mubr.bf16.mxu0 0
        %595 = vmatmul.mubr.bf16.gmra.mrb[0].mxu0 %v470
        %v596 = vpop.f32.mrb[0].mxu0
        %v597 = vadd.f32 %v404, %v596
        %v598 = vpop.f32.mrb[0].mxu0
        %v599 = vpop.f32.mrb[0].mxu0
        %v600 = vadd.f32 %v407, %v599
        %v601 = vpop.f32.mrb[0].mxu0
        %602 = vmatprep.mubr.bf16.mxu0 0
        %603 = vmatmul.mubr.bf16.gmra.mrb[0].mxu0 %v471
        %v604 = vpop.f32.mrb[0].mxu0
        %v605 = vadd.f32 %v412, %v604
        %v606 = vpop.f32.mrb[0].mxu0
        %v607 = vpop.f32.mrb[0].mxu0
        %v608 = vadd.f32 %v415, %v607
        %v609 = vpop.f32.mrb[0].mxu0
        %610 = vmatprep.mubr.bf16.mxu0 0
        %611 = vmatmul.mubr.bf16.gmra.mrb[0].mxu0 %v472
        %v612 = vpop.f32.mrb[0].mxu0
        %v613 = vadd.f32 %v420, %v612
        %v614 = vpop.f32.mrb[0].mxu0
        %v615 = vpop.f32.mrb[0].mxu0
        %v616 = vadd.f32 %v423, %v615
        %v617 = vpop.f32.mrb[0].mxu0
        %618 = vmatprep.mubr.bf16.mxu0 0
        %619 = vmatmul.mubr.bf16.gmra.mrb[0].mxu0 %v473
        %v620 = vpop.f32.mrb[0].mxu0
        %v621 = vadd.f32 %v428, %v620
        %v622 = vpop.f32.mrb[0].mxu0
        %v623 = vpop.f32.mrb[0].mxu0
        %v624 = vadd.f32 %v431, %v623
        %v625 = vpop.f32.mrb[0].mxu0
        %626 = vdwg.mxu0
        %v627 = vld [vmem:[%s172] sm:$0xf]
        %v628 = vld [vmem:[%s172 + $0x4] sm:$0x1]
        %v629 = vld [vmem:[%s172 + $0x8] sm:$0xf]
        %v630 = vld [vmem:[%s172 + $0xc] sm:$0x1]
        %v631 = vld [vmem:[%s172 + $0x10] sm:$0xf]
        %v632 = vld [vmem:[%s172 + $0x14] sm:$0x1]
        %v633 = vld [vmem:[%s172 + $0x18] sm:$0xf]
        %v634 = vld [vmem:[%s172 + $0x1c] sm:$0x1]
        %v635 = vld [vmem:[%s172 + $0x20] sm:$0xf]
        %v636 = vld [vmem:[%s172 + $0x24] sm:$0x1]
        %v637 = vld [vmem:[%s172 + $0x28] sm:$0xf]
        %v638 = vld [vmem:[%s172 + $0x2c] sm:$0x1]
        %v639 = vld [vmem:[%s172 + $0x30] sm:$0xf]
        %v640 = vld [vmem:[%s172 + $0x34] sm:$0x1]
        %v641 = vld [vmem:[%s172 + $0x38] sm:$0xf]
        %v642 = vld [vmem:[%s172 + $0x3c] sm:$0x1]
        %v643 = vld [vmem:[%s172 + $0x120] sm:$0xf]
        %v644 = vld [vmem:[%s172 + $0x124] sm:$0x1]
        %v645 = vld [vmem:[%s172 + $0x128] sm:$0xf]
        %v646 = vld [vmem:[%s172 + $0x12c] sm:$0x1]
        %v647 = vld [vmem:[%s172 + $0x130] sm:$0xf]
        %v648 = vld [vmem:[%s172 + $0x134] sm:$0x1]
        %v649 = vld [vmem:[%s172 + $0x138] sm:$0xf]
        %v650 = vld [vmem:[%s172 + $0x13c] sm:$0x1]
        %v651 = vld [vmem:[%s172 + $0x140] sm:$0xf]
        %v652 = vld [vmem:[%s172 + $0x144] sm:$0x1]
        %v653 = vld [vmem:[%s172 + $0x148] sm:$0xf]
        %v654 = vld [vmem:[%s172 + $0x14c] sm:$0x1]
        %v655 = vld [vmem:[%s172 + $0x150] sm:$0xf]
        %v656 = vld [vmem:[%s172 + $0x154] sm:$0x1]
        %v657 = vld [vmem:[%s172 + $0x158] sm:$0xf]
        %v658 = vld [vmem:[%s172 + $0x15c] sm:$0x1]
        %vm659 = vsmask.f32 3328
        %vm660 = vsmask.f32 7440
        %vm661 = vmor %vm659, %vm660
        %v663 = vshrl.u32 %v627, 16
        %v665 = vrot.slane %v663, 4
        %v666 = vshll.u32 %v627, 16
        %v668 = vrot.slane %v666, 5
        %v669 = vor.u32 %v665, %v668
        %v670 = vrot.slane %v669, 4
        %v672 = vshll.u32 %v628, 16
        %v674 = vrot.slane %v672, 5
        %v675 = vsel %vm661, %v670, %v674
        %v677 = vshrl.u32 %v629, 16
        %v679 = vrot.slane %v677, 4
        %v680 = vshll.u32 %v629, 16
        %v682 = vrot.slane %v680, 5
        %v683 = vor.u32 %v679, %v682
        %v684 = vrot.slane %v683, 4
        %v686 = vshll.u32 %v630, 16
        %v688 = vrot.slane %v686, 5
        %v689 = vsel %vm661, %v684, %v688
        %v691 = vshrl.u32 %v631, 16
        %v693 = vrot.slane %v691, 4
        %v694 = vshll.u32 %v631, 16
        %v696 = vrot.slane %v694, 5
        %v697 = vor.u32 %v693, %v696
        %v698 = vrot.slane %v697, 4
        %v700 = vshll.u32 %v632, 16
        %v702 = vrot.slane %v700, 5
        %v703 = vsel %vm661, %v698, %v702
        %v705 = vshrl.u32 %v633, 16
        %v707 = vrot.slane %v705, 4
        %v708 = vshll.u32 %v633, 16
        %v710 = vrot.slane %v708, 5
        %v711 = vor.u32 %v707, %v710
        %v712 = vrot.slane %v711, 4
        %v714 = vshll.u32 %v634, 16
        %v716 = vrot.slane %v714, 5
        %v717 = vsel %vm661, %v712, %v716
        %v719 = vshrl.u32 %v635, 16
        %v721 = vrot.slane %v719, 4
        %v722 = vshll.u32 %v635, 16
        %v724 = vrot.slane %v722, 5
        %v725 = vor.u32 %v721, %v724
        %v726 = vrot.slane %v725, 4
        %v728 = vshll.u32 %v636, 16
        %v730 = vrot.slane %v728, 5
        %v731 = vsel %vm661, %v726, %v730
        %v733 = vshrl.u32 %v637, 16
        %v735 = vrot.slane %v733, 4
        %v736 = vshll.u32 %v637, 16
        %v738 = vrot.slane %v736, 5
        %v739 = vor.u32 %v735, %v738
        %v740 = vrot.slane %v739, 4
        %v742 = vshll.u32 %v638, 16
        %v744 = vrot.slane %v742, 5
        %v745 = vsel %vm661, %v740, %v744
        %v747 = vshrl.u32 %v639, 16
        %v749 = vrot.slane %v747, 4
        %v750 = vshll.u32 %v639, 16
        %v752 = vrot.slane %v750, 5
        %v753 = vor.u32 %v749, %v752
        %v754 = vrot.slane %v753, 4
        %v756 = vshll.u32 %v640, 16
        %v758 = vrot.slane %v756, 5
        %v759 = vsel %vm661, %v754, %v758
        %v761 = vshrl.u32 %v641, 16
        %v763 = vrot.slane %v761, 4
        %v764 = vshll.u32 %v641, 16
        %v766 = vrot.slane %v764, 5
        %v767 = vor.u32 %v763, %v766
        %v768 = vrot.slane %v767, 4
        %v770 = vshll.u32 %v642, 16
        %v772 = vrot.slane %v770, 5
        %v773 = vsel %vm661, %v768, %v772
        %v775 = vshrl.u32 %v643, 16
        %v777 = vrot.slane %v775, 4
        %v778 = vshll.u32 %v643, 16
        %v780 = vrot.slane %v778, 5
        %v781 = vor.u32 %v777, %v780
        %v782 = vrot.slane %v781, 4
        %v784 = vshll.u32 %v644, 16
        %v786 = vrot.slane %v784, 5
        %v787 = vsel %vm661, %v782, %v786
        %v789 = vshrl.u32 %v645, 16
        %v791 = vrot.slane %v789, 4
        %v792 = vshll.u32 %v645, 16
        %v794 = vrot.slane %v792, 5
        %v795 = vor.u32 %v791, %v794
        %v796 = vrot.slane %v795, 4
        %v798 = vshll.u32 %v646, 16
        %v800 = vrot.slane %v798, 5
        %v801 = vsel %vm661, %v796, %v800
        %v803 = vshrl.u32 %v647, 16
        %v805 = vrot.slane %v803, 4
        %v806 = vshll.u32 %v647, 16
        %v808 = vrot.slane %v806, 5
        %v809 = vor.u32 %v805, %v808
        %v810 = vrot.slane %v809, 4
        %v812 = vshll.u32 %v648, 16
        %v814 = vrot.slane %v812, 5
        %v815 = vsel %vm661, %v810, %v814
        %v817 = vshrl.u32 %v649, 16
        %v819 = vrot.slane %v817, 4
        %v820 = vshll.u32 %v649, 16
        %v822 = vrot.slane %v820, 5
        %v823 = vor.u32 %v819, %v822
        %v824 = vrot.slane %v823, 4
        %v826 = vshll.u32 %v650, 16
        %v828 = vrot.slane %v826, 5
        %v829 = vsel %vm661, %v824, %v828
        %v831 = vshrl.u32 %v651, 16
        %v833 = vrot.slane %v831, 4
        %v834 = vshll.u32 %v651, 16
        %v836 = vrot.slane %v834, 5
        %v837 = vor.u32 %v833, %v836
        %v838 = vrot.slane %v837, 4
        %v840 = vshll.u32 %v652, 16
        %v842 = vrot.slane %v840, 5
        %v843 = vsel %vm661, %v838, %v842
        %v845 = vshrl.u32 %v653, 16
        %v847 = vrot.slane %v845, 4
        %v848 = vshll.u32 %v653, 16
        %v850 = vrot.slane %v848, 5
        %v851 = vor.u32 %v847, %v850
        %v852 = vrot.slane %v851, 4
        %v854 = vshll.u32 %v654, 16
        %v856 = vrot.slane %v854, 5
        %v857 = vsel %vm661, %v852, %v856
        %v859 = vshrl.u32 %v655, 16
        %v861 = vrot.slane %v859, 4
        %v862 = vshll.u32 %v655, 16
        %v864 = vrot.slane %v862, 5
        %v865 = vor.u32 %v861, %v864
        %v866 = vrot.slane %v865, 4
        %v868 = vshll.u32 %v656, 16
        %v870 = vrot.slane %v868, 5
        %v871 = vsel %vm661, %v866, %v870
        %v873 = vshrl.u32 %v657, 16
        %v875 = vrot.slane %v873, 4
        %v876 = vshll.u32 %v657, 16
        %v878 = vrot.slane %v876, 5
        %v879 = vor.u32 %v875, %v878
        %v880 = vrot.slane %v879, 4
        %v882 = vshll.u32 %v658, 16
        %v884 = vrot.slane %v882, 5
        %v885 = vsel %vm661, %v880, %v884
        %v886 = vld [vmem:[%s1 + $0x80] sm:$0xf]
        %v887 = vld [vmem:[%s1 + $0x84] sm:$0xf]
        %v888 = vld [vmem:[%s1 + $0x88] sm:$0xf]
        %v889 = vld [vmem:[%s1 + $0x8c] sm:$0xf]
        %v890 = vld [vmem:[%s1 + $0x90] sm:$0xf]
        %v891 = vld [vmem:[%s1 + $0x94] sm:$0xf]
        %v892 = vld [vmem:[%s1 + $0x98] sm:$0xf]
        %v893 = vld [vmem:[%s1 + $0x9c] sm:$0xf]
        %v894 = vld [vmem:[%s1 + $0xa0] sm:$0xf]
        %v895 = vld [vmem:[%s1 + $0xa4] sm:$0xf]
        %v896 = vld [vmem:[%s1 + $0xa8] sm:$0xf]
        %v897 = vld [vmem:[%s1 + $0xac] sm:$0xf]
        %v898 = vld [vmem:[%s1 + $0xb0] sm:$0xf]
        %v899 = vld [vmem:[%s1 + $0xb4] sm:$0xf]
        %v900 = vld [vmem:[%s1 + $0xb8] sm:$0xf]
        %v901 = vld [vmem:[%s1 + $0xbc] sm:$0xf]
        %v902 = vunpack.c.l.b16 %v675
        %v903 = vunpack.c.l.b16 %v689
        %v904 = vunpack.c.l.b16 %v703
        %v905 = vunpack.c.l.b16 %v717
        %v906 = vunpack.c.l.b16 %v731
        %v907 = vunpack.c.l.b16 %v745
        %v908 = vunpack.c.l.b16 %v759
        %v909 = vunpack.c.l.b16 %v773
        %v910 = vunpack.c.l.b16 %v787
        %v911 = vunpack.c.l.b16 %v801
        %v912 = vunpack.c.l.b16 %v815
        %v913 = vunpack.c.l.b16 %v829
        %v914 = vunpack.c.l.b16 %v843
        %v915 = vunpack.c.l.b16 %v857
        %v916 = vunpack.c.l.b16 %v871
        %v917 = vunpack.c.l.b16 %v885
        %v918 = vpack.c.b16 %v903, %v902
        %v919 = vpack.c.b16 %v905, %v904
        %v920 = vpack.c.b16 %v907, %v906
        %v921 = vpack.c.b16 %v909, %v908
        %v922 = vpack.c.b16 %v911, %v910
        %v923 = vpack.c.b16 %v913, %v912
        %v924 = vpack.c.b16 %v915, %v914
        %v925 = vpack.c.b16 %v917, %v916
        %v950 = vunpack.c.l.b16 %v886
        %v951 = vunpack.c.l.b16 %v887
        %v952 = vunpack.c.l.b16 %v888
        %v953 = vunpack.c.l.b16 %v889
        %v954 = vunpack.c.l.b16 %v890
        %v955 = vunpack.c.l.b16 %v891
        %v956 = vunpack.c.l.b16 %v892
        %v957 = vunpack.c.l.b16 %v893
        %v958 = vunpack.c.l.b16 %v894
        %v959 = vunpack.c.l.b16 %v895
        %v960 = vunpack.c.l.b16 %v896
        %v961 = vunpack.c.l.b16 %v897
        %v962 = vunpack.c.l.b16 %v898
        %v963 = vunpack.c.l.b16 %v899
        %v964 = vunpack.c.l.b16 %v900
        %v965 = vunpack.c.l.b16 %v901
        %v966 = vpack.c.b16 %v951, %v950
        %v967 = vpack.c.b16 %v953, %v952
        %v968 = vpack.c.b16 %v955, %v954
        %v969 = vpack.c.b16 %v957, %v956
        %v970 = vpack.c.b16 %v959, %v958
        %v971 = vpack.c.b16 %v961, %v960
        %v972 = vpack.c.b16 %v963, %v962
        %v973 = vpack.c.b16 %v965, %v964
        %982 = vmatprep.subr.bf16.mxu0 0
        %983 = vmatpush1.bf16.msra.mxu0 %v966
        %984 = vmatprep.subr.bf16.mxu0 0
        %985 = vmatpush1.bf16.msra.mxu0 %v967
        %986 = vmatprep.subr.bf16.mxu0 0
        %987 = vmatpush1.bf16.msra.mxu0 %v968
        %988 = vmatprep.subr.bf16.mxu0 0
        %989 = vmatpush1.bf16.msra.mxu0 %v969
        %990 = vmatprep.subr.bf16.mxu0 0
        %991 = vmatpush1.bf16.msra.mxu0 %v970
        %992 = vmatprep.subr.bf16.mxu0 0
        %993 = vmatpush1.bf16.msra.mxu0 %v971
        %994 = vmatprep.subr.bf16.mxu0 0
        %995 = vmatpush1.bf16.msra.mxu0 %v972
        %996 = vmatprep.subr.bf16.mxu0 0
        %997 = vmatpush1.bf16.msra.mxu0 %v973
        %998 = vmatprep.subr.bf16.mxu0 0
        %999 = vmatpush1.bf16.msra.mxu0 0
        %1000 = vmatprep.subr.bf16.mxu0 0
        %1001 = vmatpush1.bf16.msra.mxu0 0
        %1002 = vmatprep.subr.bf16.mxu0 0
        %1003 = vmatpush1.bf16.msra.mxu0 0
        %1004 = vmatprep.subr.bf16.mxu0 0
        %1005 = vmatpush1.bf16.msra.mxu0 0
        %1006 = vmatprep.subr.bf16.mxu0 0
        %1007 = vmatpush1.bf16.msra.mxu0 0
        %1008 = vmatprep.subr.bf16.mxu0 0
        %1009 = vmatpush1.bf16.msra.mxu0 0
        %1010 = vmatprep.subr.bf16.mxu0 0
        %1011 = vmatpush1.bf16.msra.mxu0 0
        %1012 = vmatprep.subr.bf16.mxu0 0
        %1013 = vmatpush1.bf16.msra.mxu0 0
        %1014 = vmatprep.mubr.bf16.mxu0 0
        %1015 = vmatmul.mubr.bf16.gmra.mrb[0].mxu0 %v918
        %v1016 = vpop.f32.mrb[0].mxu0
        %v1017 = vadd.f32 0.0, %v1016
        %v1018 = vpop.f32.mrb[0].mxu0
        %v1019 = vpop.f32.mrb[0].mxu0
        %v1020 = vadd.f32 0.0, %v1019
        %v1021 = vpop.f32.mrb[0].mxu0
        %1022 = vmatprep.mubr.bf16.mxu0 0
        %1023 = vmatmul.mubr.bf16.gmra.mrb[0].mxu0 %v919
        %v1024 = vpop.f32.mrb[0].mxu0
        %v1025 = vadd.f32 0.0, %v1024
        %v1026 = vpop.f32.mrb[0].mxu0
        %v1027 = vpop.f32.mrb[0].mxu0
        %v1028 = vadd.f32 0.0, %v1027
        %v1029 = vpop.f32.mrb[0].mxu0
        %1030 = vmatprep.mubr.bf16.mxu0 0
        %1031 = vmatmul.mubr.bf16.gmra.mrb[0].mxu0 %v920
        %v1032 = vpop.f32.mrb[0].mxu0
        %v1033 = vadd.f32 0.0, %v1032
        %v1034 = vpop.f32.mrb[0].mxu0
        %v1035 = vpop.f32.mrb[0].mxu0
        %v1036 = vadd.f32 0.0, %v1035
        %v1037 = vpop.f32.mrb[0].mxu0
        %1038 = vmatprep.mubr.bf16.mxu0 0
        %1039 = vmatmul.mubr.bf16.gmra.mrb[0].mxu0 %v921
        %v1040 = vpop.f32.mrb[0].mxu0
        %v1041 = vadd.f32 0.0, %v1040
        %v1042 = vpop.f32.mrb[0].mxu0
        %v1043 = vpop.f32.mrb[0].mxu0
        %v1044 = vadd.f32 0.0, %v1043
        %v1045 = vpop.f32.mrb[0].mxu0
        %1046 = vmatprep.mubr.bf16.mxu0 0
        %1047 = vmatmul.mubr.bf16.gmra.mrb[0].mxu0 %v922
        %v1048 = vpop.f32.mrb[0].mxu0
        %v1049 = vadd.f32 0.0, %v1048
        %v1050 = vpop.f32.mrb[0].mxu0
        %v1051 = vpop.f32.mrb[0].mxu0
        %v1052 = vadd.f32 0.0, %v1051
        %v1053 = vpop.f32.mrb[0].mxu0
        %1054 = vmatprep.mubr.bf16.mxu0 0
        %1055 = vmatmul.mubr.bf16.gmra.mrb[0].mxu0 %v923
        %v1056 = vpop.f32.mrb[0].mxu0
        %v1057 = vadd.f32 0.0, %v1056
        %v1058 = vpop.f32.mrb[0].mxu0
        %v1059 = vpop.f32.mrb[0].mxu0
        %v1060 = vadd.f32 0.0, %v1059
        %v1061 = vpop.f32.mrb[0].mxu0
        %1062 = vmatprep.mubr.bf16.mxu0 0
        %1063 = vmatmul.mubr.bf16.gmra.mrb[0].mxu0 %v924
        %v1064 = vpop.f32.mrb[0].mxu0
        %v1065 = vadd.f32 0.0, %v1064
        %v1066 = vpop.f32.mrb[0].mxu0
        %v1067 = vpop.f32.mrb[0].mxu0
        %v1068 = vadd.f32 0.0, %v1067
        %v1069 = vpop.f32.mrb[0].mxu0
        %1070 = vmatprep.mubr.bf16.mxu0 0
        %1071 = vmatmul.mubr.bf16.gmra.mrb[0].mxu0 %v925
        %v1072 = vpop.f32.mrb[0].mxu0
        %v1073 = vadd.f32 0.0, %v1072
        %v1074 = vpop.f32.mrb[0].mxu0
        %v1075 = vpop.f32.mrb[0].mxu0
        %v1076 = vadd.f32 0.0, %v1075
        %v1077 = vpop.f32.mrb[0].mxu0
        %1078 = vdwg.mxu0
        %v1079 = vadd.f32 %v565, %v1017
        %v1080 = vadd.f32 %v568, %v1020
        %v1081 = vadd.f32 %v573, %v1025
        %v1082 = vadd.f32 %v576, %v1028
        %v1083 = vadd.f32 %v581, %v1033
        %v1084 = vadd.f32 %v584, %v1036
        %v1085 = vadd.f32 %v589, %v1041
        %v1086 = vadd.f32 %v592, %v1044
        %v1087 = vadd.f32 %v597, %v1049
        %v1088 = vadd.f32 %v600, %v1052
        %v1089 = vadd.f32 %v605, %v1057
        %v1090 = vadd.f32 %v608, %v1060
        %v1091 = vadd.f32 %v613, %v1065
        %v1092 = vadd.f32 %v616, %v1068
        %v1093 = vadd.f32 %v621, %v1073
        %v1094 = vadd.f32 %v624, %v1076
        %s1095 = scalar_lea.vmem %s172, 144
        %v1096 = vld [vmem:[%s1095] sm:$0xf]
        %v1097 = vld [vmem:[%s1095 + $0x8] sm:$0xf]
        %v1098 = vld [vmem:[%s1095 + $0x10] sm:$0xf]
        %v1099 = vld [vmem:[%s1095 + $0x18] sm:$0xf]
        %v1100 = vld [vmem:[%s1095 + $0x20] sm:$0xf]
        %v1101 = vld [vmem:[%s1095 + $0x28] sm:$0xf]
        %v1102 = vld [vmem:[%s1095 + $0x30] sm:$0xf]
        %v1103 = vld [vmem:[%s1095 + $0x38] sm:$0xf]
        %v1104 = vld [vmem:[%s1095 + $0x120] sm:$0xf]
        %v1105 = vld [vmem:[%s1095 + $0x128] sm:$0xf]
        %v1106 = vld [vmem:[%s1095 + $0x130] sm:$0xf]
        %v1107 = vld [vmem:[%s1095 + $0x138] sm:$0xf]
        %v1108 = vld [vmem:[%s1095 + $0x140] sm:$0xf]
        %v1109 = vld [vmem:[%s1095 + $0x148] sm:$0xf]
        %v1110 = vld [vmem:[%s1095 + $0x150] sm:$0xf]
        %v1111 = vld [vmem:[%s1095 + $0x158] sm:$0xf]
        %v1112 = vld [vmem:[%s1 + $0xc0] sm:$0xf]
        %v1113 = vld [vmem:[%s1 + $0xc4] sm:$0xf]
        %v1114 = vld [vmem:[%s1 + $0xc8] sm:$0xf]
        %v1115 = vld [vmem:[%s1 + $0xcc] sm:$0xf]
        %v1116 = vld [vmem:[%s1 + $0xd0] sm:$0xf]
        %v1117 = vld [vmem:[%s1 + $0xd4] sm:$0xf]
        %v1118 = vld [vmem:[%s1 + $0xd8] sm:$0xf]
        %v1119 = vld [vmem:[%s1 + $0xdc] sm:$0xf]
        %v1120 = vld [vmem:[%s1 + $0xe0] sm:$0xf]
        %v1121 = vld [vmem:[%s1 + $0xe4] sm:$0xf]
        %v1122 = vld [vmem:[%s1 + $0xe8] sm:$0xf]
        %v1123 = vld [vmem:[%s1 + $0xec] sm:$0xf]
        %v1124 = vld [vmem:[%s1 + $0xf0] sm:$0xf]
        %v1125 = vld [vmem:[%s1 + $0xf4] sm:$0xf]
        %v1126 = vld [vmem:[%s1 + $0xf8] sm:$0xf]
        %v1127 = vld [vmem:[%s1 + $0xfc] sm:$0xf]
        %v1144 = vunpack.c.l.b16 %v1096
        %v1145 = vunpack.c.l.b16 %v1097
        %v1146 = vunpack.c.l.b16 %v1098
        %v1147 = vunpack.c.l.b16 %v1099
        %v1148 = vunpack.c.l.b16 %v1100
        %v1149 = vunpack.c.l.b16 %v1101
        %v1150 = vunpack.c.l.b16 %v1102
        %v1151 = vunpack.c.l.b16 %v1103
        %v1152 = vunpack.c.l.b16 %v1104
        %v1153 = vunpack.c.l.b16 %v1105
        %v1154 = vunpack.c.l.b16 %v1106
        %v1155 = vunpack.c.l.b16 %v1107
        %v1156 = vunpack.c.l.b16 %v1108
        %v1157 = vunpack.c.l.b16 %v1109
        %v1158 = vunpack.c.l.b16 %v1110
        %v1159 = vunpack.c.l.b16 %v1111
        %v1160 = vpack.c.b16 %v1145, %v1144
        %v1161 = vpack.c.b16 %v1147, %v1146
        %v1162 = vpack.c.b16 %v1149, %v1148
        %v1163 = vpack.c.b16 %v1151, %v1150
        %v1164 = vpack.c.b16 %v1153, %v1152
        %v1165 = vpack.c.b16 %v1155, %v1154
        %v1166 = vpack.c.b16 %v1157, %v1156
        %v1167 = vpack.c.b16 %v1159, %v1158
        %v1192 = vunpack.c.l.b16 %v1112
        %v1193 = vunpack.c.l.b16 %v1113
        %v1194 = vunpack.c.l.b16 %v1114
        %v1195 = vunpack.c.l.b16 %v1115
        %v1196 = vunpack.c.l.b16 %v1116
        %v1197 = vunpack.c.l.b16 %v1117
        %v1198 = vunpack.c.l.b16 %v1118
        %v1199 = vunpack.c.l.b16 %v1119
        %v1200 = vunpack.c.l.b16 %v1120
        %v1201 = vunpack.c.l.b16 %v1121
        %v1202 = vunpack.c.l.b16 %v1122
        %v1203 = vunpack.c.l.b16 %v1123
        %v1204 = vunpack.c.l.b16 %v1124
        %v1205 = vunpack.c.l.b16 %v1125
        %v1206 = vunpack.c.l.b16 %v1126
        %v1207 = vunpack.c.l.b16 %v1127
        %v1208 = vpack.c.b16 %v1193, %v1192
        %v1209 = vpack.c.b16 %v1195, %v1194
        %v1210 = vpack.c.b16 %v1197, %v1196
        %v1211 = vpack.c.b16 %v1199, %v1198
        %v1212 = vpack.c.b16 %v1201, %v1200
        %v1213 = vpack.c.b16 %v1203, %v1202
        %v1214 = vpack.c.b16 %v1205, %v1204
        %v1215 = vpack.c.b16 %v1207, %v1206
        %1224 = vmatprep.subr.bf16.mxu0 0
        %1225 = vmatpush1.bf16.msra.mxu0 %v1208
        %1226 = vmatprep.subr.bf16.mxu0 0
        %1227 = vmatpush1.bf16.msra.mxu0 %v1209
        %1228 = vmatprep.subr.bf16.mxu0 0
        %1229 = vmatpush1.bf16.msra.mxu0 %v1210
        %1230 = vmatprep.subr.bf16.mxu0 0
        %1231 = vmatpush1.bf16.msra.mxu0 %v1211
        %1232 = vmatprep.subr.bf16.mxu0 0
        %1233 = vmatpush1.bf16.msra.mxu0 %v1212
        %1234 = vmatprep.subr.bf16.mxu0 0
        %1235 = vmatpush1.bf16.msra.mxu0 %v1213
        %1236 = vmatprep.subr.bf16.mxu0 0
        %1237 = vmatpush1.bf16.msra.mxu0 %v1214
        %1238 = vmatprep.subr.bf16.mxu0 0
        %1239 = vmatpush1.bf16.msra.mxu0 %v1215
        %1240 = vmatprep.subr.bf16.mxu0 0
        %1241 = vmatpush1.bf16.msra.mxu0 0
        %1242 = vmatprep.subr.bf16.mxu0 0
        %1243 = vmatpush1.bf16.msra.mxu0 0
        %1244 = vmatprep.subr.bf16.mxu0 0
        %1245 = vmatpush1.bf16.msra.mxu0 0
        %1246 = vmatprep.subr.bf16.mxu0 0
        %1247 = vmatpush1.bf16.msra.mxu0 0
        %1248 = vmatprep.subr.bf16.mxu0 0
        %1249 = vmatpush1.bf16.msra.mxu0 0
        %1250 = vmatprep.subr.bf16.mxu0 0
        %1251 = vmatpush1.bf16.msra.mxu0 0
        %1252 = vmatprep.subr.bf16.mxu0 0
        %1253 = vmatpush1.bf16.msra.mxu0 0
        %1254 = vmatprep.subr.bf16.mxu0 0
        %1255 = vmatpush1.bf16.msra.mxu0 0
        %1256 = vmatprep.mubr.bf16.mxu0 0
        %1257 = vmatmul.mubr.bf16.gmra.mrb[0].mxu0 %v1160
        %v1258 = vpop.f32.mrb[0].mxu0
        %v1259 = vadd.f32 0.0, %v1258
        %v1260 = vpop.f32.mrb[0].mxu0
        %v1261 = vpop.f32.mrb[0].mxu0
        %v1262 = vadd.f32 0.0, %v1261
        %v1263 = vpop.f32.mrb[0].mxu0
        %1264 = vmatprep.mubr.bf16.mxu0 0
        %1265 = vmatmul.mubr.bf16.gmra.mrb[0].mxu0 %v1161
        %v1266 = vpop.f32.mrb[0].mxu0
        %v1267 = vadd.f32 0.0, %v1266
        %v1268 = vpop.f32.mrb[0].mxu0
        %v1269 = vpop.f32.mrb[0].mxu0
        %v1270 = vadd.f32 0.0, %v1269
        %v1271 = vpop.f32.mrb[0].mxu0
        %1272 = vmatprep.mubr.bf16.mxu0 0
        %1273 = vmatmul.mubr.bf16.gmra.mrb[0].mxu0 %v1162
        %v1274 = vpop.f32.mrb[0].mxu0
        %v1275 = vadd.f32 0.0, %v1274
        %v1276 = vpop.f32.mrb[0].mxu0
        %v1277 = vpop.f32.mrb[0].mxu0
        %v1278 = vadd.f32 0.0, %v1277
        %v1279 = vpop.f32.mrb[0].mxu0
        %1280 = vmatprep.mubr.bf16.mxu0 0
        %1281 = vmatmul.mubr.bf16.gmra.mrb[0].mxu0 %v1163
        %v1282 = vpop.f32.mrb[0].mxu0
        %v1283 = vadd.f32 0.0, %v1282
        %v1284 = vpop.f32.mrb[0].mxu0
        %v1285 = vpop.f32.mrb[0].mxu0
        %v1286 = vadd.f32 0.0, %v1285
        %v1287 = vpop.f32.mrb[0].mxu0
        %1288 = vmatprep.mubr.bf16.mxu0 0
        %1289 = vmatmul.mubr.bf16.gmra.mrb[0].mxu0 %v1164
        %v1290 = vpop.f32.mrb[0].mxu0
        %v1291 = vadd.f32 0.0, %v1290
        %v1292 = vpop.f32.mrb[0].mxu0
        %v1293 = vpop.f32.mrb[0].mxu0
        %v1294 = vadd.f32 0.0, %v1293
        %v1295 = vpop.f32.mrb[0].mxu0
        %1296 = vmatprep.mubr.bf16.mxu0 0
        %1297 = vmatmul.mubr.bf16.gmra.mrb[0].mxu0 %v1165
        %v1298 = vpop.f32.mrb[0].mxu0
        %v1299 = vadd.f32 0.0, %v1298
        %v1300 = vpop.f32.mrb[0].mxu0
        %v1301 = vpop.f32.mrb[0].mxu0
        %v1302 = vadd.f32 0.0, %v1301
        %v1303 = vpop.f32.mrb[0].mxu0
        %1304 = vmatprep.mubr.bf16.mxu0 0
        %1305 = vmatmul.mubr.bf16.gmra.mrb[0].mxu0 %v1166
        %v1306 = vpop.f32.mrb[0].mxu0
        %v1307 = vadd.f32 0.0, %v1306
        %v1308 = vpop.f32.mrb[0].mxu0
        %v1309 = vpop.f32.mrb[0].mxu0
        %v1310 = vadd.f32 0.0, %v1309
        %v1311 = vpop.f32.mrb[0].mxu0
        %1312 = vmatprep.mubr.bf16.mxu0 0
        %1313 = vmatmul.mubr.bf16.gmra.mrb[0].mxu0 %v1167
        %v1314 = vpop.f32.mrb[0].mxu0
        %v1315 = vadd.f32 0.0, %v1314
        %v1316 = vpop.f32.mrb[0].mxu0
        %v1317 = vpop.f32.mrb[0].mxu0
        %v1318 = vadd.f32 0.0, %v1317
        %v1319 = vpop.f32.mrb[0].mxu0
        %1320 = vdwg.mxu0
        %v1321 = vadd.f32 %v1079, %v1259
        %v1322 = vadd.f32 %v1080, %v1262
        %v1323 = vadd.f32 %v1081, %v1267
        %v1324 = vadd.f32 %v1082, %v1270
        %v1325 = vadd.f32 %v1083, %v1275
        %v1326 = vadd.f32 %v1084, %v1278
        %v1327 = vadd.f32 %v1085, %v1283
        %v1328 = vadd.f32 %v1086, %v1286
        %v1329 = vadd.f32 %v1087, %v1291
        %v1330 = vadd.f32 %v1088, %v1294
        %v1331 = vadd.f32 %v1089, %v1299
        %v1332 = vadd.f32 %v1090, %v1302
        %v1333 = vadd.f32 %v1091, %v1307
        %v1334 = vadd.f32 %v1092, %v1310
        %v1335 = vadd.f32 %v1093, %v1315
        %v1336 = vadd.f32 %v1094, %v1318
        %s1337 = scalar_lea.vmem %s172, 216
        %v1338 = vld [vmem:[%s1337] sm:$0xf]
        %v1339 = vld [vmem:[%s1337 + $0x8] sm:$0xf]
        %v1340 = vld [vmem:[%s1337 + $0x10] sm:$0xf]
        %v1341 = vld [vmem:[%s1337 + $0x18] sm:$0xf]
        %v1342 = vld [vmem:[%s1337 + $0x20] sm:$0xf]
        %v1343 = vld [vmem:[%s1337 + $0x28] sm:$0xf]
        %v1344 = vld [vmem:[%s1337 + $0x30] sm:$0xf]
        %v1345 = vld [vmem:[%s1337 + $0x38] sm:$0xf]
        %v1346 = vld [vmem:[%s1337 + $0x120] sm:$0xf]
        %v1347 = vld [vmem:[%s1337 + $0x128] sm:$0xf]
        %v1348 = vld [vmem:[%s1337 + $0x130] sm:$0xf]
        %v1349 = vld [vmem:[%s1337 + $0x138] sm:$0xf]
        %v1350 = vld [vmem:[%s1337 + $0x140] sm:$0xf]
        %v1351 = vld [vmem:[%s1337 + $0x148] sm:$0xf]
        %v1352 = vld [vmem:[%s1337 + $0x150] sm:$0xf]
        %v1353 = vld [vmem:[%s1337 + $0x158] sm:$0xf]
        %v1354 = vld [vmem:[%s1 + $0x100] sm:$0xf]
        %v1355 = vld [vmem:[%s1 + $0x104] sm:$0xf]
        %v1356 = vld [vmem:[%s1 + $0x108] sm:$0xf]
        %v1357 = vld [vmem:[%s1 + $0x10c] sm:$0xf]
        %v1358 = vld [vmem:[%s1 + $0x110] sm:$0xf]
        %v1359 = vld [vmem:[%s1 + $0x114] sm:$0xf]
        %v1360 = vld [vmem:[%s1 + $0x118] sm:$0xf]
        %v1361 = vld [vmem:[%s1 + $0x11c] sm:$0xf]
        %v1362 = vld [vmem:[%s1 + $0x120] sm:$0xf]
        %v1363 = vld [vmem:[%s1 + $0x124] sm:$0xf]
        %v1364 = vld [vmem:[%s1 + $0x128] sm:$0xf]
        %v1365 = vld [vmem:[%s1 + $0x12c] sm:$0xf]
        %v1366 = vld [vmem:[%s1 + $0x130] sm:$0xf]
        %v1367 = vld [vmem:[%s1 + $0x134] sm:$0xf]
        %v1368 = vld [vmem:[%s1 + $0x138] sm:$0xf]
        %v1369 = vld [vmem:[%s1 + $0x13c] sm:$0xf]
        %v1386 = vunpack.c.l.b16 %v1338
        %v1387 = vunpack.c.l.b16 %v1339
        %v1388 = vunpack.c.l.b16 %v1340
        %v1389 = vunpack.c.l.b16 %v1341
        %v1390 = vunpack.c.l.b16 %v1342
        %v1391 = vunpack.c.l.b16 %v1343
        %v1392 = vunpack.c.l.b16 %v1344
        %v1393 = vunpack.c.l.b16 %v1345
        %v1394 = vunpack.c.l.b16 %v1346
        %v1395 = vunpack.c.l.b16 %v1347
        %v1396 = vunpack.c.l.b16 %v1348
        %v1397 = vunpack.c.l.b16 %v1349
        %v1398 = vunpack.c.l.b16 %v1350
        %v1399 = vunpack.c.l.b16 %v1351
        %v1400 = vunpack.c.l.b16 %v1352
        %v1401 = vunpack.c.l.b16 %v1353
        %v1402 = vpack.c.b16 %v1387, %v1386
        %v1403 = vpack.c.b16 %v1389, %v1388
        %v1404 = vpack.c.b16 %v1391, %v1390
        %v1405 = vpack.c.b16 %v1393, %v1392
        %v1406 = vpack.c.b16 %v1395, %v1394
        %v1407 = vpack.c.b16 %v1397, %v1396
        %v1408 = vpack.c.b16 %v1399, %v1398
        %v1409 = vpack.c.b16 %v1401, %v1400
        %v1434 = vunpack.c.l.b16 %v1354
        %v1435 = vunpack.c.l.b16 %v1355
        %v1436 = vunpack.c.l.b16 %v1356
        %v1437 = vunpack.c.l.b16 %v1357
        %v1438 = vunpack.c.l.b16 %v1358
        %v1439 = vunpack.c.l.b16 %v1359
        %v1440 = vunpack.c.l.b16 %v1360
        %v1441 = vunpack.c.l.b16 %v1361
        %v1442 = vunpack.c.l.b16 %v1362
        %v1443 = vunpack.c.l.b16 %v1363
        %v1444 = vunpack.c.l.b16 %v1364
        %v1445 = vunpack.c.l.b16 %v1365
        %v1446 = vunpack.c.l.b16 %v1366
        %v1447 = vunpack.c.l.b16 %v1367
        %v1448 = vunpack.c.l.b16 %v1368
        %v1449 = vunpack.c.l.b16 %v1369
        %v1450 = vpack.c.b16 %v1435, %v1434
        %v1451 = vpack.c.b16 %v1437, %v1436
        %v1452 = vpack.c.b16 %v1439, %v1438
        %v1453 = vpack.c.b16 %v1441, %v1440
        %v1454 = vpack.c.b16 %v1443, %v1442
        %v1455 = vpack.c.b16 %v1445, %v1444
        %v1456 = vpack.c.b16 %v1447, %v1446
        %v1457 = vpack.c.b16 %v1449, %v1448
        %1466 = vmatprep.subr.bf16.mxu0 0
        %1467 = vmatpush1.bf16.msra.mxu0 %v1450
        %1468 = vmatprep.subr.bf16.mxu0 0
        %1469 = vmatpush1.bf16.msra.mxu0 %v1451
        %1470 = vmatprep.subr.bf16.mxu0 0
        %1471 = vmatpush1.bf16.msra.mxu0 %v1452
        %1472 = vmatprep.subr.bf16.mxu0 0
        %1473 = vmatpush1.bf16.msra.mxu0 %v1453
        %1474 = vmatprep.subr.bf16.mxu0 0
        %1475 = vmatpush1.bf16.msra.mxu0 %v1454
        %1476 = vmatprep.subr.bf16.mxu0 0
        %1477 = vmatpush1.bf16.msra.mxu0 %v1455
        %1478 = vmatprep.subr.bf16.mxu0 0
        %1479 = vmatpush1.bf16.msra.mxu0 %v1456
        %1480 = vmatprep.subr.bf16.mxu0 0
        %1481 = vmatpush1.bf16.msra.mxu0 %v1457
        %1482 = vmatprep.subr.bf16.mxu0 0
        %1483 = vmatpush1.bf16.msra.mxu0 0
        %1484 = vmatprep.subr.bf16.mxu0 0
        %1485 = vmatpush1.bf16.msra.mxu0 0
        %1486 = vmatprep.subr.bf16.mxu0 0
        %1487 = vmatpush1.bf16.msra.mxu0 0
        %1488 = vmatprep.subr.bf16.mxu0 0
        %1489 = vmatpush1.bf16.msra.mxu0 0
        %1490 = vmatprep.subr.bf16.mxu0 0
        %1491 = vmatpush1.bf16.msra.mxu0 0
        %1492 = vmatprep.subr.bf16.mxu0 0
        %1493 = vmatpush1.bf16.msra.mxu0 0
        %1494 = vmatprep.subr.bf16.mxu0 0
        %1495 = vmatpush1.bf16.msra.mxu0 0
        %1496 = vmatprep.subr.bf16.mxu0 0
        %1497 = vmatpush1.bf16.msra.mxu0 0
        %1498 = vmatprep.mubr.bf16.mxu0 0
        %1499 = vmatmul.mubr.bf16.gmra.mrb[0].mxu0 %v1402
        %v1500 = vpop.f32.mrb[0].mxu0
        %v1501 = vadd.f32 0.0, %v1500
        %v1502 = vpop.f32.mrb[0].mxu0
        %v1503 = vpop.f32.mrb[0].mxu0
        %v1504 = vadd.f32 0.0, %v1503
        %v1505 = vpop.f32.mrb[0].mxu0
        %1506 = vmatprep.mubr.bf16.mxu0 0
        %1507 = vmatmul.mubr.bf16.gmra.mrb[0].mxu0 %v1403
        %v1508 = vpop.f32.mrb[0].mxu0
        %v1509 = vadd.f32 0.0, %v1508
        %v1510 = vpop.f32.mrb[0].mxu0
        %v1511 = vpop.f32.mrb[0].mxu0
        %v1512 = vadd.f32 0.0, %v1511
        %v1513 = vpop.f32.mrb[0].mxu0
        %1514 = vmatprep.mubr.bf16.mxu0 0
        %1515 = vmatmul.mubr.bf16.gmra.mrb[0].mxu0 %v1404
        %v1516 = vpop.f32.mrb[0].mxu0
        %v1517 = vadd.f32 0.0, %v1516
        %v1518 = vpop.f32.mrb[0].mxu0
        %v1519 = vpop.f32.mrb[0].mxu0
        %v1520 = vadd.f32 0.0, %v1519
        %v1521 = vpop.f32.mrb[0].mxu0
        %1522 = vmatprep.mubr.bf16.mxu0 0
        %1523 = vmatmul.mubr.bf16.gmra.mrb[0].mxu0 %v1405
        %v1524 = vpop.f32.mrb[0].mxu0
        %v1525 = vadd.f32 0.0, %v1524
        %v1526 = vpop.f32.mrb[0].mxu0
        %v1527 = vpop.f32.mrb[0].mxu0
        %v1528 = vadd.f32 0.0, %v1527
        %v1529 = vpop.f32.mrb[0].mxu0
        %1530 = vmatprep.mubr.bf16.mxu0 0
        %1531 = vmatmul.mubr.bf16.gmra.mrb[0].mxu0 %v1406
        %v1532 = vpop.f32.mrb[0].mxu0
        %v1533 = vadd.f32 0.0, %v1532
        %v1534 = vpop.f32.mrb[0].mxu0
        %v1535 = vpop.f32.mrb[0].mxu0
        %v1536 = vadd.f32 0.0, %v1535
        %v1537 = vpop.f32.mrb[0].mxu0
        %1538 = vmatprep.mubr.bf16.mxu0 0
        %1539 = vmatmul.mubr.bf16.gmra.mrb[0].mxu0 %v1407
        %v1540 = vpop.f32.mrb[0].mxu0
        %v1541 = vadd.f32 0.0, %v1540
        %v1542 = vpop.f32.mrb[0].mxu0
        %v1543 = vpop.f32.mrb[0].mxu0
        %v1544 = vadd.f32 0.0, %v1543
        %v1545 = vpop.f32.mrb[0].mxu0
        %1546 = vmatprep.mubr.bf16.mxu0 0
        %1547 = vmatmul.mubr.bf16.gmra.mrb[0].mxu0 %v1408
        %v1548 = vpop.f32.mrb[0].mxu0
        %v1549 = vadd.f32 0.0, %v1548
        %v1550 = vpop.f32.mrb[0].mxu0
        %v1551 = vpop.f32.mrb[0].mxu0
        %v1552 = vadd.f32 0.0, %v1551
        %v1553 = vpop.f32.mrb[0].mxu0
        %1554 = vmatprep.mubr.bf16.mxu0 0
        %1555 = vmatmul.mubr.bf16.gmra.mrb[0].mxu0 %v1409
        %v1556 = vpop.f32.mrb[0].mxu0
        %v1557 = vadd.f32 0.0, %v1556
        %v1558 = vpop.f32.mrb[0].mxu0
        %v1559 = vpop.f32.mrb[0].mxu0
        %v1560 = vadd.f32 0.0, %v1559
        %v1561 = vpop.f32.mrb[0].mxu0
        %1562 = vdwg.mxu0
        %v1563 = vadd.f32 %v1321, %v1501
        %v1564 = vadd.f32 %v1322, %v1504
        %v1565 = vadd.f32 %v1323, %v1509
        %v1566 = vadd.f32 %v1324, %v1512
        %v1567 = vadd.f32 %v1325, %v1517
        %v1568 = vadd.f32 %v1326, %v1520
        %v1569 = vadd.f32 %v1327, %v1525
        %v1570 = vadd.f32 %v1328, %v1528
        %v1571 = vadd.f32 %v1329, %v1533
        %v1572 = vadd.f32 %v1330, %v1536
        %v1573 = vadd.f32 %v1331, %v1541
        %v1574 = vadd.f32 %v1332, %v1544
        %v1575 = vadd.f32 %v1333, %v1549
        %v1576 = vadd.f32 %v1334, %v1552
        %v1577 = vadd.f32 %v1335, %v1557
        %v1578 = vadd.f32 %v1336, %v1560
        %v1579 = vld [vmem:[%s1095] sm:$0xf]
        %v1580 = vld [vmem:[%s1095 + $0x4] sm:$0x1]
        %v1581 = vld [vmem:[%s1095 + $0x8] sm:$0xf]
        %v1582 = vld [vmem:[%s1095 + $0xc] sm:$0x1]
        %v1583 = vld [vmem:[%s1095 + $0x10] sm:$0xf]
        %v1584 = vld [vmem:[%s1095 + $0x14] sm:$0x1]
        %v1585 = vld [vmem:[%s1095 + $0x18] sm:$0xf]
        %v1586 = vld [vmem:[%s1095 + $0x1c] sm:$0x1]
        %v1587 = vld [vmem:[%s1095 + $0x20] sm:$0xf]
        %v1588 = vld [vmem:[%s1095 + $0x24] sm:$0x1]
        %v1589 = vld [vmem:[%s1095 + $0x28] sm:$0xf]
        %v1590 = vld [vmem:[%s1095 + $0x2c] sm:$0x1]
        %v1591 = vld [vmem:[%s1095 + $0x30] sm:$0xf]
        %v1592 = vld [vmem:[%s1095 + $0x34] sm:$0x1]
        %v1593 = vld [vmem:[%s1095 + $0x38] sm:$0xf]
        %v1594 = vld [vmem:[%s1095 + $0x3c] sm:$0x1]
        %v1595 = vld [vmem:[%s1095 + $0x120] sm:$0xf]
        %v1596 = vld [vmem:[%s1095 + $0x124] sm:$0x1]
        %v1597 = vld [vmem:[%s1095 + $0x128] sm:$0xf]
        %v1598 = vld [vmem:[%s1095 + $0x12c] sm:$0x1]
        %v1599 = vld [vmem:[%s1095 + $0x130] sm:$0xf]
        %v1600 = vld [vmem:[%s1095 + $0x134] sm:$0x1]
        %v1601 = vld [vmem:[%s1095 + $0x138] sm:$0xf]
        %v1602 = vld [vmem:[%s1095 + $0x13c] sm:$0x1]
        %v1603 = vld [vmem:[%s1095 + $0x140] sm:$0xf]
        %v1604 = vld [vmem:[%s1095 + $0x144] sm:$0x1]
        %v1605 = vld [vmem:[%s1095 + $0x148] sm:$0xf]
        %v1606 = vld [vmem:[%s1095 + $0x14c] sm:$0x1]
        %v1607 = vld [vmem:[%s1095 + $0x150] sm:$0xf]
        %v1608 = vld [vmem:[%s1095 + $0x154] sm:$0x1]
        %v1609 = vld [vmem:[%s1095 + $0x158] sm:$0xf]
        %v1610 = vld [vmem:[%s1095 + $0x15c] sm:$0x1]
        %v1612 = vshrl.u32 %v1579, 16
        %v1614 = vrot.slane %v1612, 4
        %v1615 = vshll.u32 %v1579, 16
        %v1617 = vrot.slane %v1615, 5
        %v1618 = vor.u32 %v1614, %v1617
        %v1619 = vrot.slane %v1618, 4
        %v1621 = vshll.u32 %v1580, 16
        %v1623 = vrot.slane %v1621, 5
        %v1624 = vsel %vm661, %v1619, %v1623
        %v1626 = vshrl.u32 %v1581, 16
        %v1628 = vrot.slane %v1626, 4
        %v1629 = vshll.u32 %v1581, 16
        %v1631 = vrot.slane %v1629, 5
        %v1632 = vor.u32 %v1628, %v1631
        %v1633 = vrot.slane %v1632, 4
        %v1635 = vshll.u32 %v1582, 16
        %v1637 = vrot.slane %v1635, 5
        %v1638 = vsel %vm661, %v1633, %v1637
        %v1640 = vshrl.u32 %v1583, 16
        %v1642 = vrot.slane %v1640, 4
        %v1643 = vshll.u32 %v1583, 16
        %v1645 = vrot.slane %v1643, 5
        %v1646 = vor.u32 %v1642, %v1645
        %v1647 = vrot.slane %v1646, 4
        %v1649 = vshll.u32 %v1584, 16
        %v1651 = vrot.slane %v1649, 5
        %v1652 = vsel %vm661, %v1647, %v1651
        %v1654 = vshrl.u32 %v1585, 16
        %v1656 = vrot.slane %v1654, 4
        %v1657 = vshll.u32 %v1585, 16
        %v1659 = vrot.slane %v1657, 5
        %v1660 = vor.u32 %v1656, %v1659
        %v1661 = vrot.slane %v1660, 4
        %v1663 = vshll.u32 %v1586, 16
        %v1665 = vrot.slane %v1663, 5
        %v1666 = vsel %vm661, %v1661, %v1665
        %v1668 = vshrl.u32 %v1587, 16
        %v1670 = vrot.slane %v1668, 4
        %v1671 = vshll.u32 %v1587, 16
        %v1673 = vrot.slane %v1671, 5
        %v1674 = vor.u32 %v1670, %v1673
        %v1675 = vrot.slane %v1674, 4
        %v1677 = vshll.u32 %v1588, 16
        %v1679 = vrot.slane %v1677, 5
        %v1680 = vsel %vm661, %v1675, %v1679
        %v1682 = vshrl.u32 %v1589, 16
        %v1684 = vrot.slane %v1682, 4
        %v1685 = vshll.u32 %v1589, 16
        %v1687 = vrot.slane %v1685, 5
        %v1688 = vor.u32 %v1684, %v1687
        %v1689 = vrot.slane %v1688, 4
        %v1691 = vshll.u32 %v1590, 16
        %v1693 = vrot.slane %v1691, 5
        %v1694 = vsel %vm661, %v1689, %v1693
        %v1696 = vshrl.u32 %v1591, 16
        %v1698 = vrot.slane %v1696, 4
        %v1699 = vshll.u32 %v1591, 16
        %v1701 = vrot.slane %v1699, 5
        %v1702 = vor.u32 %v1698, %v1701
        %v1703 = vrot.slane %v1702, 4
        %v1705 = vshll.u32 %v1592, 16
        %v1707 = vrot.slane %v1705, 5
        %v1708 = vsel %vm661, %v1703, %v1707
        %v1710 = vshrl.u32 %v1593, 16
        %v1712 = vrot.slane %v1710, 4
        %v1713 = vshll.u32 %v1593, 16
        %v1715 = vrot.slane %v1713, 5
        %v1716 = vor.u32 %v1712, %v1715
        %v1717 = vrot.slane %v1716, 4
        %v1719 = vshll.u32 %v1594, 16
        %v1721 = vrot.slane %v1719, 5
        %v1722 = vsel %vm661, %v1717, %v1721
        %v1724 = vshrl.u32 %v1595, 16
        %v1726 = vrot.slane %v1724, 4
        %v1727 = vshll.u32 %v1595, 16
        %v1729 = vrot.slane %v1727, 5
        %v1730 = vor.u32 %v1726, %v1729
        %v1731 = vrot.slane %v1730, 4
        %v1733 = vshll.u32 %v1596, 16
        %v1735 = vrot.slane %v1733, 5
        %v1736 = vsel %vm661, %v1731, %v1735
        %v1738 = vshrl.u32 %v1597, 16
        %v1740 = vrot.slane %v1738, 4
        %v1741 = vshll.u32 %v1597, 16
        %v1743 = vrot.slane %v1741, 5
        %v1744 = vor.u32 %v1740, %v1743
        %v1745 = vrot.slane %v1744, 4
        %v1747 = vshll.u32 %v1598, 16
        %v1749 = vrot.slane %v1747, 5
        %v1750 = vsel %vm661, %v1745, %v1749
        %v1752 = vshrl.u32 %v1599, 16
        %v1754 = vrot.slane %v1752, 4
        %v1755 = vshll.u32 %v1599, 16
        %v1757 = vrot.slane %v1755, 5
        %v1758 = vor.u32 %v1754, %v1757
        %v1759 = vrot.slane %v1758, 4
        %v1761 = vshll.u32 %v1600, 16
        %v1763 = vrot.slane %v1761, 5
        %v1764 = vsel %vm661, %v1759, %v1763
        %v1766 = vshrl.u32 %v1601, 16
        %v1768 = vrot.slane %v1766, 4
        %v1769 = vshll.u32 %v1601, 16
        %v1771 = vrot.slane %v1769, 5
        %v1772 = vor.u32 %v1768, %v1771
        %v1773 = vrot.slane %v1772, 4
        %v1775 = vshll.u32 %v1602, 16
        %v1777 = vrot.slane %v1775, 5
        %v1778 = vsel %vm661, %v1773, %v1777
        %v1780 = vshrl.u32 %v1603, 16
        %v1782 = vrot.slane %v1780, 4
        %v1783 = vshll.u32 %v1603, 16
        %v1785 = vrot.slane %v1783, 5
        %v1786 = vor.u32 %v1782, %v1785
        %v1787 = vrot.slane %v1786, 4
        %v1789 = vshll.u32 %v1604, 16
        %v1791 = vrot.slane %v1789, 5
        %v1792 = vsel %vm661, %v1787, %v1791
        %v1794 = vshrl.u32 %v1605, 16
        %v1796 = vrot.slane %v1794, 4
        %v1797 = vshll.u32 %v1605, 16
        %v1799 = vrot.slane %v1797, 5
        %v1800 = vor.u32 %v1796, %v1799
        %v1801 = vrot.slane %v1800, 4
        %v1803 = vshll.u32 %v1606, 16
        %v1805 = vrot.slane %v1803, 5
        %v1806 = vsel %vm661, %v1801, %v1805
        %v1808 = vshrl.u32 %v1607, 16
        %v1810 = vrot.slane %v1808, 4
        %v1811 = vshll.u32 %v1607, 16
        %v1813 = vrot.slane %v1811, 5
        %v1814 = vor.u32 %v1810, %v1813
        %v1815 = vrot.slane %v1814, 4
        %v1817 = vshll.u32 %v1608, 16
        %v1819 = vrot.slane %v1817, 5
        %v1820 = vsel %vm661, %v1815, %v1819
        %v1822 = vshrl.u32 %v1609, 16
        %v1824 = vrot.slane %v1822, 4
        %v1825 = vshll.u32 %v1609, 16
        %v1827 = vrot.slane %v1825, 5
        %v1828 = vor.u32 %v1824, %v1827
        %v1829 = vrot.slane %v1828, 4
        %v1831 = vshll.u32 %v1610, 16
        %v1833 = vrot.slane %v1831, 5
        %v1834 = vsel %vm661, %v1829, %v1833
        %v1835 = vld [vmem:[%s1 + $0x140] sm:$0xf]
        %v1836 = vld [vmem:[%s1 + $0x144] sm:$0xf]
        %v1837 = vld [vmem:[%s1 + $0x148] sm:$0xf]
        %v1838 = vld [vmem:[%s1 + $0x14c] sm:$0xf]
        %v1839 = vld [vmem:[%s1 + $0x150] sm:$0xf]
        %v1840 = vld [vmem:[%s1 + $0x154] sm:$0xf]
        %v1841 = vld [vmem:[%s1 + $0x158] sm:$0xf]
        %v1842 = vld [vmem:[%s1 + $0x15c] sm:$0xf]
        %v1843 = vld [vmem:[%s1 + $0x160] sm:$0xf]
        %v1844 = vld [vmem:[%s1 + $0x164] sm:$0xf]
        %v1845 = vld [vmem:[%s1 + $0x168] sm:$0xf]
        %v1846 = vld [vmem:[%s1 + $0x16c] sm:$0xf]
        %v1847 = vld [vmem:[%s1 + $0x170] sm:$0xf]
        %v1848 = vld [vmem:[%s1 + $0x174] sm:$0xf]
        %v1849 = vld [vmem:[%s1 + $0x178] sm:$0xf]
        %v1850 = vld [vmem:[%s1 + $0x17c] sm:$0xf]
        %v1851 = vunpack.c.l.b16 %v1624
        %v1852 = vunpack.c.l.b16 %v1638
        %v1853 = vunpack.c.l.b16 %v1652
        %v1854 = vunpack.c.l.b16 %v1666
        %v1855 = vunpack.c.l.b16 %v1680
        %v1856 = vunpack.c.l.b16 %v1694
        %v1857 = vunpack.c.l.b16 %v1708
        %v1858 = vunpack.c.l.b16 %v1722
        %v1859 = vunpack.c.l.b16 %v1736
        %v1860 = vunpack.c.l.b16 %v1750
        %v1861 = vunpack.c.l.b16 %v1764
        %v1862 = vunpack.c.l.b16 %v1778
        %v1863 = vunpack.c.l.b16 %v1792
        %v1864 = vunpack.c.l.b16 %v1806
        %v1865 = vunpack.c.l.b16 %v1820
        %v1866 = vunpack.c.l.b16 %v1834
        %v1867 = vpack.c.b16 %v1852, %v1851
        %v1868 = vpack.c.b16 %v1854, %v1853
        %v1869 = vpack.c.b16 %v1856, %v1855
        %v1870 = vpack.c.b16 %v1858, %v1857
        %v1871 = vpack.c.b16 %v1860, %v1859
        %v1872 = vpack.c.b16 %v1862, %v1861
        %v1873 = vpack.c.b16 %v1864, %v1863
        %v1874 = vpack.c.b16 %v1866, %v1865
        %v1899 = vunpack.c.l.b16 %v1835
        %v1900 = vunpack.c.l.b16 %v1836
        %v1901 = vunpack.c.l.b16 %v1837
        %v1902 = vunpack.c.l.b16 %v1838
        %v1903 = vunpack.c.l.b16 %v1839
        %v1904 = vunpack.c.l.b16 %v1840
        %v1905 = vunpack.c.l.b16 %v1841
        %v1906 = vunpack.c.l.b16 %v1842
        %v1907 = vunpack.c.l.b16 %v1843
        %v1908 = vunpack.c.l.b16 %v1844
        %v1909 = vunpack.c.l.b16 %v1845
        %v1910 = vunpack.c.l.b16 %v1846
        %v1911 = vunpack.c.l.b16 %v1847
        %v1912 = vunpack.c.l.b16 %v1848
        %v1913 = vunpack.c.l.b16 %v1849
        %v1914 = vunpack.c.l.b16 %v1850
        %v1915 = vpack.c.b16 %v1900, %v1899
        %v1916 = vpack.c.b16 %v1902, %v1901
        %v1917 = vpack.c.b16 %v1904, %v1903
        %v1918 = vpack.c.b16 %v1906, %v1905
        %v1919 = vpack.c.b16 %v1908, %v1907
        %v1920 = vpack.c.b16 %v1910, %v1909
        %v1921 = vpack.c.b16 %v1912, %v1911
        %v1922 = vpack.c.b16 %v1914, %v1913
        %1931 = vmatprep.subr.bf16.mxu0 0
        %1932 = vmatpush1.bf16.msra.mxu0 %v1915
        %1933 = vmatprep.subr.bf16.mxu0 0
        %1934 = vmatpush1.bf16.msra.mxu0 %v1916
        %1935 = vmatprep.subr.bf16.mxu0 0
        %1936 = vmatpush1.bf16.msra.mxu0 %v1917
        %1937 = vmatprep.subr.bf16.mxu0 0
        %1938 = vmatpush1.bf16.msra.mxu0 %v1918
        %1939 = vmatprep.subr.bf16.mxu0 0
        %1940 = vmatpush1.bf16.msra.mxu0 %v1919
        %1941 = vmatprep.subr.bf16.mxu0 0
        %1942 = vmatpush1.bf16.msra.mxu0 %v1920
        %1943 = vmatprep.subr.bf16.mxu0 0
        %1944 = vmatpush1.bf16.msra.mxu0 %v1921
        %1945 = vmatprep.subr.bf16.mxu0 0
        %1946 = vmatpush1.bf16.msra.mxu0 %v1922
        %1947 = vmatprep.subr.bf16.mxu0 0
        %1948 = vmatpush1.bf16.msra.mxu0 0
        %1949 = vmatprep.subr.bf16.mxu0 0
        %1950 = vmatpush1.bf16.msra.mxu0 0
        %1951 = vmatprep.subr.bf16.mxu0 0
        %1952 = vmatpush1.bf16.msra.mxu0 0
        %1953 = vmatprep.subr.bf16.mxu0 0
        %1954 = vmatpush1.bf16.msra.mxu0 0
        %1955 = vmatprep.subr.bf16.mxu0 0
        %1956 = vmatpush1.bf16.msra.mxu0 0
        %1957 = vmatprep.subr.bf16.mxu0 0
        %1958 = vmatpush1.bf16.msra.mxu0 0
        %1959 = vmatprep.subr.bf16.mxu0 0
        %1960 = vmatpush1.bf16.msra.mxu0 0
        %1961 = vmatprep.subr.bf16.mxu0 0
        %1962 = vmatpush1.bf16.msra.mxu0 0
        %1963 = vmatprep.mubr.bf16.mxu0 0
        %1964 = vmatmul.mubr.bf16.gmra.mrb[0].mxu0 %v1867
        %v1965 = vpop.f32.mrb[0].mxu0
        %v1966 = vadd.f32 0.0, %v1965
        %v1967 = vpop.f32.mrb[0].mxu0
        %v1968 = vpop.f32.mrb[0].mxu0
        %v1969 = vadd.f32 0.0, %v1968
        %v1970 = vpop.f32.mrb[0].mxu0
        %1971 = vmatprep.mubr.bf16.mxu0 0
        %1972 = vmatmul.mubr.bf16.gmra.mrb[0].mxu0 %v1868
        %v1973 = vpop.f32.mrb[0].mxu0
        %v1974 = vadd.f32 0.0, %v1973
        %v1975 = vpop.f32.mrb[0].mxu0
        %v1976 = vpop.f32.mrb[0].mxu0
        %v1977 = vadd.f32 0.0, %v1976
        %v1978 = vpop.f32.mrb[0].mxu0
        %1979 = vmatprep.mubr.bf16.mxu0 0
        %1980 = vmatmul.mubr.bf16.gmra.mrb[0].mxu0 %v1869
        %v1981 = vpop.f32.mrb[0].mxu0
        %v1982 = vadd.f32 0.0, %v1981
        %v1983 = vpop.f32.mrb[0].mxu0
        %v1984 = vpop.f32.mrb[0].mxu0
        %v1985 = vadd.f32 0.0, %v1984
        %v1986 = vpop.f32.mrb[0].mxu0
        %1987 = vmatprep.mubr.bf16.mxu0 0
        %1988 = vmatmul.mubr.bf16.gmra.mrb[0].mxu0 %v1870
        %v1989 = vpop.f32.mrb[0].mxu0
        %v1990 = vadd.f32 0.0, %v1989
        %v1991 = vpop.f32.mrb[0].mxu0
        %v1992 = vpop.f32.mrb[0].mxu0
        %v1993 = vadd.f32 0.0, %v1992
        %v1994 = vpop.f32.mrb[0].mxu0
        %1995 = vmatprep.mubr.bf16.mxu0 0
        %1996 = vmatmul.mubr.bf16.gmra.mrb[0].mxu0 %v1871
        %v1997 = vpop.f32.mrb[0].mxu0
        %v1998 = vadd.f32 0.0, %v1997
        %v1999 = vpop.f32.mrb[0].mxu0
        %v2000 = vpop.f32.mrb[0].mxu0
        %v2001 = vadd.f32 0.0, %v2000
        %v2002 = vpop.f32.mrb[0].mxu0
        %2003 = vmatprep.mubr.bf16.mxu0 0
        %2004 = vmatmul.mubr.bf16.gmra.mrb[0].mxu0 %v1872
        %v2005 = vpop.f32.mrb[0].mxu0
        %v2006 = vadd.f32 0.0, %v2005
        %v2007 = vpop.f32.mrb[0].mxu0
        %v2008 = vpop.f32.mrb[0].mxu0
        %v2009 = vadd.f32 0.0, %v2008
        %v2010 = vpop.f32.mrb[0].mxu0
        %2011 = vmatprep.mubr.bf16.mxu0 0
        %2012 = vmatmul.mubr.bf16.gmra.mrb[0].mxu0 %v1873
        %v2013 = vpop.f32.mrb[0].mxu0
        %v2014 = vadd.f32 0.0, %v2013
        %v2015 = vpop.f32.mrb[0].mxu0
        %v2016 = vpop.f32.mrb[0].mxu0
        %v2017 = vadd.f32 0.0, %v2016
        %v2018 = vpop.f32.mrb[0].mxu0
        %2019 = vmatprep.mubr.bf16.mxu0 0
        %2020 = vmatmul.mubr.bf16.gmra.mrb[0].mxu0 %v1874
        %v2021 = vpop.f32.mrb[0].mxu0
        %v2022 = vadd.f32 0.0, %v2021
        %v2023 = vpop.f32.mrb[0].mxu0
        %v2024 = vpop.f32.mrb[0].mxu0
        %v2025 = vadd.f32 0.0, %v2024
        %v2026 = vpop.f32.mrb[0].mxu0
        %2027 = vdwg.mxu0
        %v2028 = vadd.f32 %v1563, %v1966
        %v2029 = vadd.f32 %v1564, %v1969
        %v2030 = vadd.f32 %v1565, %v1974
        %v2031 = vadd.f32 %v1566, %v1977
        %v2032 = vadd.f32 %v1567, %v1982
        %v2033 = vadd.f32 %v1568, %v1985
        %v2034 = vadd.f32 %v1569, %v1990
        %v2035 = vadd.f32 %v1570, %v1993
        %v2036 = vadd.f32 %v1571, %v1998
        %v2037 = vadd.f32 %v1572, %v2001
        %v2038 = vadd.f32 %v1573, %v2006
        %v2039 = vadd.f32 %v1574, %v2009
        %v2040 = vadd.f32 %v1575, %v2014
        %v2041 = vadd.f32 %v1576, %v2017
        %v2042 = vadd.f32 %v1577, %v2022
        %v2043 = vadd.f32 %v1578, %v2025
        %s2044 = scalar_lea.vmem %s172, 8
        %v2045 = vld [vmem:[%s2044] sm:$0xf]
        %v2046 = vld [vmem:[%s2044 + $0x8] sm:$0xf]
        %v2047 = vld [vmem:[%s2044 + $0x10] sm:$0xf]
        %v2048 = vld [vmem:[%s2044 + $0x18] sm:$0xf]
        %v2049 = vld [vmem:[%s2044 + $0x20] sm:$0xf]
        %v2050 = vld [vmem:[%s2044 + $0x28] sm:$0xf]
        %v2051 = vld [vmem:[%s2044 + $0x30] sm:$0xf]
        %v2052 = vld [vmem:[%s2044 + $0x38] sm:$0xf]
        %v2053 = vld [vmem:[%s2044 + $0x120] sm:$0xf]
        %v2054 = vld [vmem:[%s2044 + $0x128] sm:$0xf]
        %v2055 = vld [vmem:[%s2044 + $0x130] sm:$0xf]
        %v2056 = vld [vmem:[%s2044 + $0x138] sm:$0xf]
        %v2057 = vld [vmem:[%s2044 + $0x140] sm:$0xf]
        %v2058 = vld [vmem:[%s2044 + $0x148] sm:$0xf]
        %v2059 = vld [vmem:[%s2044 + $0x150] sm:$0xf]
        %v2060 = vld [vmem:[%s2044 + $0x158] sm:$0xf]
        %v2061 = vld [vmem:[%s1 + $0x180] sm:$0xf]
        %v2062 = vld [vmem:[%s1 + $0x184] sm:$0xf]
        %v2063 = vld [vmem:[%s1 + $0x188] sm:$0xf]
        %v2064 = vld [vmem:[%s1 + $0x18c] sm:$0xf]
        %v2065 = vld [vmem:[%s1 + $0x190] sm:$0xf]
        %v2066 = vld [vmem:[%s1 + $0x194] sm:$0xf]
        %v2067 = vld [vmem:[%s1 + $0x198] sm:$0xf]
        %v2068 = vld [vmem:[%s1 + $0x19c] sm:$0xf]
        %v2069 = vld [vmem:[%s1 + $0x1a0] sm:$0xf]
        %v2070 = vld [vmem:[%s1 + $0x1a4] sm:$0xf]
        %v2071 = vld [vmem:[%s1 + $0x1a8] sm:$0xf]
        %v2072 = vld [vmem:[%s1 + $0x1ac] sm:$0xf]
        %v2073 = vld [vmem:[%s1 + $0x1b0] sm:$0xf]
        %v2074 = vld [vmem:[%s1 + $0x1b4] sm:$0xf]
        %v2075 = vld [vmem:[%s1 + $0x1b8] sm:$0xf]
        %v2076 = vld [vmem:[%s1 + $0x1bc] sm:$0xf]
        %v2093 = vunpack.c.l.b16 %v2045
        %v2094 = vunpack.c.l.b16 %v2046
        %v2095 = vunpack.c.l.b16 %v2047
        %v2096 = vunpack.c.l.b16 %v2048
        %v2097 = vunpack.c.l.b16 %v2049
        %v2098 = vunpack.c.l.b16 %v2050
        %v2099 = vunpack.c.l.b16 %v2051
        %v2100 = vunpack.c.l.b16 %v2052
        %v2101 = vunpack.c.l.b16 %v2053
        %v2102 = vunpack.c.l.b16 %v2054
        %v2103 = vunpack.c.l.b16 %v2055
        %v2104 = vunpack.c.l.b16 %v2056
        %v2105 = vunpack.c.l.b16 %v2057
        %v2106 = vunpack.c.l.b16 %v2058
        %v2107 = vunpack.c.l.b16 %v2059
        %v2108 = vunpack.c.l.b16 %v2060
        %v2109 = vpack.c.b16 %v2094, %v2093
        %v2110 = vpack.c.b16 %v2096, %v2095
        %v2111 = vpack.c.b16 %v2098, %v2097
        %v2112 = vpack.c.b16 %v2100, %v2099
        %v2113 = vpack.c.b16 %v2102, %v2101
        %v2114 = vpack.c.b16 %v2104, %v2103
        %v2115 = vpack.c.b16 %v2106, %v2105
        %v2116 = vpack.c.b16 %v2108, %v2107
        %v2141 = vunpack.c.l.b16 %v2061
        %v2142 = vunpack.c.l.b16 %v2062
        %v2143 = vunpack.c.l.b16 %v2063
        %v2144 = vunpack.c.l.b16 %v2064
        %v2145 = vunpack.c.l.b16 %v2065
        %v2146 = vunpack.c.l.b16 %v2066
        %v2147 = vunpack.c.l.b16 %v2067
        %v2148 = vunpack.c.l.b16 %v2068
        %v2149 = vunpack.c.l.b16 %v2069
        %v2150 = vunpack.c.l.b16 %v2070
        %v2151 = vunpack.c.l.b16 %v2071
        %v2152 = vunpack.c.l.b16 %v2072
        %v2153 = vunpack.c.l.b16 %v2073
        %v2154 = vunpack.c.l.b16 %v2074
        %v2155 = vunpack.c.l.b16 %v2075
        %v2156 = vunpack.c.l.b16 %v2076
        %v2157 = vpack.c.b16 %v2142, %v2141
        %v2158 = vpack.c.b16 %v2144, %v2143
        %v2159 = vpack.c.b16 %v2146, %v2145
        %v2160 = vpack.c.b16 %v2148, %v2147
        %v2161 = vpack.c.b16 %v2150, %v2149
        %v2162 = vpack.c.b16 %v2152, %v2151
        %v2163 = vpack.c.b16 %v2154, %v2153
        %v2164 = vpack.c.b16 %v2156, %v2155
        %2173 = vmatprep.subr.bf16.mxu0 0
        %2174 = vmatpush1.bf16.msra.mxu0 %v2157
        %2175 = vmatprep.subr.bf16.mxu0 0
        %2176 = vmatpush1.bf16.msra.mxu0 %v2158
        %2177 = vmatprep.subr.bf16.mxu0 0
        %2178 = vmatpush1.bf16.msra.mxu0 %v2159
        %2179 = vmatprep.subr.bf16.mxu0 0
        %2180 = vmatpush1.bf16.msra.mxu0 %v2160
        %2181 = vmatprep.subr.bf16.mxu0 0
        %2182 = vmatpush1.bf16.msra.mxu0 %v2161
        %2183 = vmatprep.subr.bf16.mxu0 0
        %2184 = vmatpush1.bf16.msra.mxu0 %v2162
        %2185 = vmatprep.subr.bf16.mxu0 0
        %2186 = vmatpush1.bf16.msra.mxu0 %v2163
        %2187 = vmatprep.subr.bf16.mxu0 0
        %2188 = vmatpush1.bf16.msra.mxu0 %v2164
        %2189 = vmatprep.subr.bf16.mxu0 0
        %2190 = vmatpush1.bf16.msra.mxu0 0
        %2191 = vmatprep.subr.bf16.mxu0 0
        %2192 = vmatpush1.bf16.msra.mxu0 0
        %2193 = vmatprep.subr.bf16.mxu0 0
        %2194 = vmatpush1.bf16.msra.mxu0 0
        %2195 = vmatprep.subr.bf16.mxu0 0
        %2196 = vmatpush1.bf16.msra.mxu0 0
        %2197 = vmatprep.subr.bf16.mxu0 0
        %2198 = vmatpush1.bf16.msra.mxu0 0
        %2199 = vmatprep.subr.bf16.mxu0 0
        %2200 = vmatpush1.bf16.msra.mxu0 0
        %2201 = vmatprep.subr.bf16.mxu0 0
        %2202 = vmatpush1.bf16.msra.mxu0 0
        %2203 = vmatprep.subr.bf16.mxu0 0
        %2204 = vmatpush1.bf16.msra.mxu0 0
        %2205 = vmatprep.mubr.bf16.mxu0 0
        %2206 = vmatmul.mubr.bf16.gmra.mrb[0].mxu0 %v2109
        %v2207 = vpop.f32.mrb[0].mxu0
        %v2208 = vadd.f32 0.0, %v2207
        %v2209 = vpop.f32.mrb[0].mxu0
        %v2210 = vpop.f32.mrb[0].mxu0
        %v2211 = vadd.f32 0.0, %v2210
        %v2212 = vpop.f32.mrb[0].mxu0
        %2213 = vmatprep.mubr.bf16.mxu0 0
        %2214 = vmatmul.mubr.bf16.gmra.mrb[0].mxu0 %v2110
        %v2215 = vpop.f32.mrb[0].mxu0
        %v2216 = vadd.f32 0.0, %v2215
        %v2217 = vpop.f32.mrb[0].mxu0
        %v2218 = vpop.f32.mrb[0].mxu0
        %v2219 = vadd.f32 0.0, %v2218
        %v2220 = vpop.f32.mrb[0].mxu0
        %2221 = vmatprep.mubr.bf16.mxu0 0
        %2222 = vmatmul.mubr.bf16.gmra.mrb[0].mxu0 %v2111
        %v2223 = vpop.f32.mrb[0].mxu0
        %v2224 = vadd.f32 0.0, %v2223
        %v2225 = vpop.f32.mrb[0].mxu0
        %v2226 = vpop.f32.mrb[0].mxu0
        %v2227 = vadd.f32 0.0, %v2226
        %v2228 = vpop.f32.mrb[0].mxu0
        %2229 = vmatprep.mubr.bf16.mxu0 0
        %2230 = vmatmul.mubr.bf16.gmra.mrb[0].mxu0 %v2112
        %v2231 = vpop.f32.mrb[0].mxu0
        %v2232 = vadd.f32 0.0, %v2231
        %v2233 = vpop.f32.mrb[0].mxu0
        %v2234 = vpop.f32.mrb[0].mxu0
        %v2235 = vadd.f32 0.0, %v2234
        %v2236 = vpop.f32.mrb[0].mxu0
        %2237 = vmatprep.mubr.bf16.mxu0 0
        %2238 = vmatmul.mubr.bf16.gmra.mrb[0].mxu0 %v2113
        %v2239 = vpop.f32.mrb[0].mxu0
        %v2240 = vadd.f32 0.0, %v2239
        %v2241 = vpop.f32.mrb[0].mxu0
        %v2242 = vpop.f32.mrb[0].mxu0
        %v2243 = vadd.f32 0.0, %v2242
        %v2244 = vpop.f32.mrb[0].mxu0
        %2245 = vmatprep.mubr.bf16.mxu0 0
        %2246 = vmatmul.mubr.bf16.gmra.mrb[0].mxu0 %v2114
        %v2247 = vpop.f32.mrb[0].mxu0
        %v2248 = vadd.f32 0.0, %v2247
        %v2249 = vpop.f32.mrb[0].mxu0
        %v2250 = vpop.f32.mrb[0].mxu0
        %v2251 = vadd.f32 0.0, %v2250
        %v2252 = vpop.f32.mrb[0].mxu0
        %2253 = vmatprep.mubr.bf16.mxu0 0
        %2254 = vmatmul.mubr.bf16.gmra.mrb[0].mxu0 %v2115
        %v2255 = vpop.f32.mrb[0].mxu0
        %v2256 = vadd.f32 0.0, %v2255
        %v2257 = vpop.f32.mrb[0].mxu0
        %v2258 = vpop.f32.mrb[0].mxu0
        %v2259 = vadd.f32 0.0, %v2258
        %v2260 = vpop.f32.mrb[0].mxu0
        %2261 = vmatprep.mubr.bf16.mxu0 0
        %2262 = vmatmul.mubr.bf16.gmra.mrb[0].mxu0 %v2116
        %v2263 = vpop.f32.mrb[0].mxu0
        %v2264 = vadd.f32 0.0, %v2263
        %v2265 = vpop.f32.mrb[0].mxu0
        %v2266 = vpop.f32.mrb[0].mxu0
        %v2267 = vadd.f32 0.0, %v2266
        %v2268 = vpop.f32.mrb[0].mxu0
        %2269 = vdwg.mxu0
        %v2270 = vadd.f32 %v2028, %v2208
        %v2271 = vadd.f32 %v2029, %v2211
        %v2272 = vadd.f32 %v2030, %v2216
        %v2273 = vadd.f32 %v2031, %v2219
        %v2274 = vadd.f32 %v2032, %v2224
        %v2275 = vadd.f32 %v2033, %v2227
        %v2276 = vadd.f32 %v2034, %v2232
        %v2277 = vadd.f32 %v2035, %v2235
        %v2278 = vadd.f32 %v2036, %v2240
        %v2279 = vadd.f32 %v2037, %v2243
        %v2280 = vadd.f32 %v2038, %v2248
        %v2281 = vadd.f32 %v2039, %v2251
        %v2282 = vadd.f32 %v2040, %v2256
        %v2283 = vadd.f32 %v2041, %v2259
        %v2284 = vadd.f32 %v2042, %v2264
        %v2285 = vadd.f32 %v2043, %v2267
        %s2286 = scalar_lea.vmem %s172, 80
        %v2287 = vld [vmem:[%s2286] sm:$0xf]
        %v2288 = vld [vmem:[%s2286 + $0x8] sm:$0xf]
        %v2289 = vld [vmem:[%s2286 + $0x10] sm:$0xf]
        %v2290 = vld [vmem:[%s2286 + $0x18] sm:$0xf]
        %v2291 = vld [vmem:[%s2286 + $0x20] sm:$0xf]
        %v2292 = vld [vmem:[%s2286 + $0x28] sm:$0xf]
        %v2293 = vld [vmem:[%s2286 + $0x30] sm:$0xf]
        %v2294 = vld [vmem:[%s2286 + $0x38] sm:$0xf]
        %v2295 = vld [vmem:[%s2286 + $0x120] sm:$0xf]
        %v2296 = vld [vmem:[%s2286 + $0x128] sm:$0xf]
        %v2297 = vld [vmem:[%s2286 + $0x130] sm:$0xf]
        %v2298 = vld [vmem:[%s2286 + $0x138] sm:$0xf]
        %v2299 = vld [vmem:[%s2286 + $0x140] sm:$0xf]
        %v2300 = vld [vmem:[%s2286 + $0x148] sm:$0xf]
        %v2301 = vld [vmem:[%s2286 + $0x150] sm:$0xf]
        %v2302 = vld [vmem:[%s2286 + $0x158] sm:$0xf]
        %v2303 = vld [vmem:[%s1 + $0x1c0] sm:$0xf]
        %v2304 = vld [vmem:[%s1 + $0x1c4] sm:$0xf]
        %v2305 = vld [vmem:[%s1 + $0x1c8] sm:$0xf]
        %v2306 = vld [vmem:[%s1 + $0x1cc] sm:$0xf]
        %v2307 = vld [vmem:[%s1 + $0x1d0] sm:$0xf]
        %v2308 = vld [vmem:[%s1 + $0x1d4] sm:$0xf]
        %v2309 = vld [vmem:[%s1 + $0x1d8] sm:$0xf]
        %v2310 = vld [vmem:[%s1 + $0x1dc] sm:$0xf]
        %v2311 = vld [vmem:[%s1 + $0x1e0] sm:$0xf]
        %v2312 = vld [vmem:[%s1 + $0x1e4] sm:$0xf]
        %v2313 = vld [vmem:[%s1 + $0x1e8] sm:$0xf]
        %v2314 = vld [vmem:[%s1 + $0x1ec] sm:$0xf]
        %v2315 = vld [vmem:[%s1 + $0x1f0] sm:$0xf]
        %v2316 = vld [vmem:[%s1 + $0x1f4] sm:$0xf]
        %v2317 = vld [vmem:[%s1 + $0x1f8] sm:$0xf]
        %v2318 = vld [vmem:[%s1 + $0x1fc] sm:$0xf]
        %v2335 = vunpack.c.l.b16 %v2287
        %v2336 = vunpack.c.l.b16 %v2288
        %v2337 = vunpack.c.l.b16 %v2289
        %v2338 = vunpack.c.l.b16 %v2290
        %v2339 = vunpack.c.l.b16 %v2291
        %v2340 = vunpack.c.l.b16 %v2292
        %v2341 = vunpack.c.l.b16 %v2293
        %v2342 = vunpack.c.l.b16 %v2294
        %v2343 = vunpack.c.l.b16 %v2295
        %v2344 = vunpack.c.l.b16 %v2296
        %v2345 = vunpack.c.l.b16 %v2297
        %v2346 = vunpack.c.l.b16 %v2298
        %v2347 = vunpack.c.l.b16 %v2299
        %v2348 = vunpack.c.l.b16 %v2300
        %v2349 = vunpack.c.l.b16 %v2301
        %v2350 = vunpack.c.l.b16 %v2302
        %v2351 = vpack.c.b16 %v2336, %v2335
        %v2352 = vpack.c.b16 %v2338, %v2337
        %v2353 = vpack.c.b16 %v2340, %v2339
        %v2354 = vpack.c.b16 %v2342, %v2341
        %v2355 = vpack.c.b16 %v2344, %v2343
        %v2356 = vpack.c.b16 %v2346, %v2345
        %v2357 = vpack.c.b16 %v2348, %v2347
        %v2358 = vpack.c.b16 %v2350, %v2349
        %v2383 = vunpack.c.l.b16 %v2303
        %v2384 = vunpack.c.l.b16 %v2304
        %v2385 = vunpack.c.l.b16 %v2305
        %v2386 = vunpack.c.l.b16 %v2306
        %v2387 = vunpack.c.l.b16 %v2307
        %v2388 = vunpack.c.l.b16 %v2308
        %v2389 = vunpack.c.l.b16 %v2309
        %v2390 = vunpack.c.l.b16 %v2310
        %v2391 = vunpack.c.l.b16 %v2311
        %v2392 = vunpack.c.l.b16 %v2312
        %v2393 = vunpack.c.l.b16 %v2313
        %v2394 = vunpack.c.l.b16 %v2314
        %v2395 = vunpack.c.l.b16 %v2315
        %v2396 = vunpack.c.l.b16 %v2316
        %v2397 = vunpack.c.l.b16 %v2317
        %v2398 = vunpack.c.l.b16 %v2318
        %v2399 = vpack.c.b16 %v2384, %v2383
        %v2400 = vpack.c.b16 %v2386, %v2385
        %v2401 = vpack.c.b16 %v2388, %v2387
        %v2402 = vpack.c.b16 %v2390, %v2389
        %v2403 = vpack.c.b16 %v2392, %v2391
        %v2404 = vpack.c.b16 %v2394, %v2393
        %v2405 = vpack.c.b16 %v2396, %v2395
        %v2406 = vpack.c.b16 %v2398, %v2397
        %2415 = vmatprep.subr.bf16.mxu0 0
        %2416 = vmatpush1.bf16.msra.mxu0 %v2399
        %2417 = vmatprep.subr.bf16.mxu0 0
        %2418 = vmatpush1.bf16.msra.mxu0 %v2400
        %2419 = vmatprep.subr.bf16.mxu0 0
        %2420 = vmatpush1.bf16.msra.mxu0 %v2401
        %2421 = vmatprep.subr.bf16.mxu0 0
        %2422 = vmatpush1.bf16.msra.mxu0 %v2402
        %2423 = vmatprep.subr.bf16.mxu0 0
        %2424 = vmatpush1.bf16.msra.mxu0 %v2403
        %2425 = vmatprep.subr.bf16.mxu0 0
        %2426 = vmatpush1.bf16.msra.mxu0 %v2404
        %2427 = vmatprep.subr.bf16.mxu0 0
        %2428 = vmatpush1.bf16.msra.mxu0 %v2405
        %2429 = vmatprep.subr.bf16.mxu0 0
        %2430 = vmatpush1.bf16.msra.mxu0 %v2406
        %2431 = vmatprep.subr.bf16.mxu0 0
        %2432 = vmatpush1.bf16.msra.mxu0 0
        %2433 = vmatprep.subr.bf16.mxu0 0
        %2434 = vmatpush1.bf16.msra.mxu0 0
        %2435 = vmatprep.subr.bf16.mxu0 0
        %2436 = vmatpush1.bf16.msra.mxu0 0
        %2437 = vmatprep.subr.bf16.mxu0 0
        %2438 = vmatpush1.bf16.msra.mxu0 0
        %2439 = vmatprep.subr.bf16.mxu0 0
        %2440 = vmatpush1.bf16.msra.mxu0 0
        %2441 = vmatprep.subr.bf16.mxu0 0
        %2442 = vmatpush1.bf16.msra.mxu0 0
        %2443 = vmatprep.subr.bf16.mxu0 0
        %2444 = vmatpush1.bf16.msra.mxu0 0
        %2445 = vmatprep.subr.bf16.mxu0 0
        %2446 = vmatpush1.bf16.msra.mxu0 0
        %2447 = vmatprep.mubr.bf16.mxu0 0
        %2448 = vmatmul.mubr.bf16.gmra.mrb[0].mxu0 %v2351
        %v2449 = vpop.f32.mrb[0].mxu0
        %v2450 = vadd.f32 0.0, %v2449
        %v2451 = vpop.f32.mrb[0].mxu0
        %v2452 = vpop.f32.mrb[0].mxu0
        %v2453 = vadd.f32 0.0, %v2452
        %v2454 = vpop.f32.mrb[0].mxu0
        %2455 = vmatprep.mubr.bf16.mxu0 0
        %2456 = vmatmul.mubr.bf16.gmra.mrb[0].mxu0 %v2352
        %v2457 = vpop.f32.mrb[0].mxu0
        %v2458 = vadd.f32 0.0, %v2457
        %v2459 = vpop.f32.mrb[0].mxu0
        %v2460 = vpop.f32.mrb[0].mxu0
        %v2461 = vadd.f32 0.0, %v2460
        %v2462 = vpop.f32.mrb[0].mxu0
        %2463 = vmatprep.mubr.bf16.mxu0 0
        %2464 = vmatmul.mubr.bf16.gmra.mrb[0].mxu0 %v2353
        %v2465 = vpop.f32.mrb[0].mxu0
        %v2466 = vadd.f32 0.0, %v2465
        %v2467 = vpop.f32.mrb[0].mxu0
        %v2468 = vpop.f32.mrb[0].mxu0
        %v2469 = vadd.f32 0.0, %v2468
        %v2470 = vpop.f32.mrb[0].mxu0
        %2471 = vmatprep.mubr.bf16.mxu0 0
        %2472 = vmatmul.mubr.bf16.gmra.mrb[0].mxu0 %v2354
        %v2473 = vpop.f32.mrb[0].mxu0
        %v2474 = vadd.f32 0.0, %v2473
        %v2475 = vpop.f32.mrb[0].mxu0
        %v2476 = vpop.f32.mrb[0].mxu0
        %v2477 = vadd.f32 0.0, %v2476
        %v2478 = vpop.f32.mrb[0].mxu0
        %2479 = vmatprep.mubr.bf16.mxu0 0
        %2480 = vmatmul.mubr.bf16.gmra.mrb[0].mxu0 %v2355
        %v2481 = vpop.f32.mrb[0].mxu0
        %v2482 = vadd.f32 0.0, %v2481
        %v2483 = vpop.f32.mrb[0].mxu0
        %v2484 = vpop.f32.mrb[0].mxu0
        %v2485 = vadd.f32 0.0, %v2484
        %v2486 = vpop.f32.mrb[0].mxu0
        %2487 = vmatprep.mubr.bf16.mxu0 0
        %2488 = vmatmul.mubr.bf16.gmra.mrb[0].mxu0 %v2356
        %v2489 = vpop.f32.mrb[0].mxu0
        %v2490 = vadd.f32 0.0, %v2489
        %v2491 = vpop.f32.mrb[0].mxu0
        %v2492 = vpop.f32.mrb[0].mxu0
        %v2493 = vadd.f32 0.0, %v2492
        %v2494 = vpop.f32.mrb[0].mxu0
        %2495 = vmatprep.mubr.bf16.mxu0 0
        %2496 = vmatmul.mubr.bf16.gmra.mrb[0].mxu0 %v2357
        %v2497 = vpop.f32.mrb[0].mxu0
        %v2498 = vadd.f32 0.0, %v2497
        %v2499 = vpop.f32.mrb[0].mxu0
        %v2500 = vpop.f32.mrb[0].mxu0
        %v2501 = vadd.f32 0.0, %v2500
        %v2502 = vpop.f32.mrb[0].mxu0
        %2503 = vmatprep.mubr.bf16.mxu0 0
        %2504 = vmatmul.mubr.bf16.gmra.mrb[0].mxu0 %v2358
        %v2505 = vpop.f32.mrb[0].mxu0
        %v2506 = vadd.f32 0.0, %v2505
        %v2507 = vpop.f32.mrb[0].mxu0
        %v2508 = vpop.f32.mrb[0].mxu0
        %v2509 = vadd.f32 0.0, %v2508
        %v2510 = vpop.f32.mrb[0].mxu0
        %2511 = vdwg.mxu0
        %v2512 = vadd.f32 %v2270, %v2450
        %v2513 = vadd.f32 %v2271, %v2453
        %v2514 = vadd.f32 %v2272, %v2458
        %v2515 = vadd.f32 %v2273, %v2461
        %v2516 = vadd.f32 %v2274, %v2466
        %v2517 = vadd.f32 %v2275, %v2469
        %v2518 = vadd.f32 %v2276, %v2474
        %v2519 = vadd.f32 %v2277, %v2477
        %v2520 = vadd.f32 %v2278, %v2482
        %v2521 = vadd.f32 %v2279, %v2485
        %v2522 = vadd.f32 %v2280, %v2490
        %v2523 = vadd.f32 %v2281, %v2493
        %v2524 = vadd.f32 %v2282, %v2498
        %v2525 = vadd.f32 %v2283, %v2501
        %v2526 = vadd.f32 %v2284, %v2506
        %v2527 = vadd.f32 %v2285, %v2509
        %v2528 = vld [vmem:[%s2044] sm:$0xf]
        %v2529 = vld [vmem:[%s2044 + $0x4] sm:$0x1]
        %v2530 = vld [vmem:[%s2044 + $0x8] sm:$0xf]
        %v2531 = vld [vmem:[%s2044 + $0xc] sm:$0x1]
        %v2532 = vld [vmem:[%s2044 + $0x10] sm:$0xf]
        %v2533 = vld [vmem:[%s2044 + $0x14] sm:$0x1]
        %v2534 = vld [vmem:[%s2044 + $0x18] sm:$0xf]
        %v2535 = vld [vmem:[%s2044 + $0x1c] sm:$0x1]
        %v2536 = vld [vmem:[%s2044 + $0x20] sm:$0xf]
        %v2537 = vld [vmem:[%s2044 + $0x24] sm:$0x1]
        %v2538 = vld [vmem:[%s2044 + $0x28] sm:$0xf]
        %v2539 = vld [vmem:[%s2044 + $0x2c] sm:$0x1]
        %v2540 = vld [vmem:[%s2044 + $0x30] sm:$0xf]
        %v2541 = vld [vmem:[%s2044 + $0x34] sm:$0x1]
        %v2542 = vld [vmem:[%s2044 + $0x38] sm:$0xf]
        %v2543 = vld [vmem:[%s2044 + $0x3c] sm:$0x1]
        %v2544 = vld [vmem:[%s2044 + $0x120] sm:$0xf]
        %v2545 = vld [vmem:[%s2044 + $0x124] sm:$0x1]
        %v2546 = vld [vmem:[%s2044 + $0x128] sm:$0xf]
        %v2547 = vld [vmem:[%s2044 + $0x12c] sm:$0x1]
        %v2548 = vld [vmem:[%s2044 + $0x130] sm:$0xf]
        %v2549 = vld [vmem:[%s2044 + $0x134] sm:$0x1]
        %v2550 = vld [vmem:[%s2044 + $0x138] sm:$0xf]
        %v2551 = vld [vmem:[%s2044 + $0x13c] sm:$0x1]
        %v2552 = vld [vmem:[%s2044 + $0x140] sm:$0xf]
        %v2553 = vld [vmem:[%s2044 + $0x144] sm:$0x1]
        %v2554 = vld [vmem:[%s2044 + $0x148] sm:$0xf]
        %v2555 = vld [vmem:[%s2044 + $0x14c] sm:$0x1]
        %v2556 = vld [vmem:[%s2044 + $0x150] sm:$0xf]
        %v2557 = vld [vmem:[%s2044 + $0x154] sm:$0x1]
        %v2558 = vld [vmem:[%s2044 + $0x158] sm:$0xf]
        %v2559 = vld [vmem:[%s2044 + $0x15c] sm:$0x1]
        %v2561 = vshrl.u32 %v2528, 16
        %v2563 = vrot.slane %v2561, 4
        %v2564 = vshll.u32 %v2528, 16
        %v2566 = vrot.slane %v2564, 5
        %v2567 = vor.u32 %v2563, %v2566
        %v2568 = vrot.slane %v2567, 4
        %v2570 = vshll.u32 %v2529, 16
        %v2572 = vrot.slane %v2570, 5
        %v2573 = vsel %vm661, %v2568, %v2572
        %v2575 = vshrl.u32 %v2530, 16
        %v2577 = vrot.slane %v2575, 4
        %v2578 = vshll.u32 %v2530, 16
        %v2580 = vrot.slane %v2578, 5
        %v2581 = vor.u32 %v2577, %v2580
        %v2582 = vrot.slane %v2581, 4
        %v2584 = vshll.u32 %v2531, 16
        %v2586 = vrot.slane %v2584, 5
        %v2587 = vsel %vm661, %v2582, %v2586
        %v2589 = vshrl.u32 %v2532, 16
        %v2591 = vrot.slane %v2589, 4
        %v2592 = vshll.u32 %v2532, 16
        %v2594 = vrot.slane %v2592, 5
        %v2595 = vor.u32 %v2591, %v2594
        %v2596 = vrot.slane %v2595, 4
        %v2598 = vshll.u32 %v2533, 16
        %v2600 = vrot.slane %v2598, 5
        %v2601 = vsel %vm661, %v2596, %v2600
        %v2603 = vshrl.u32 %v2534, 16
        %v2605 = vrot.slane %v2603, 4
        %v2606 = vshll.u32 %v2534, 16
        %v2608 = vrot.slane %v2606, 5
        %v2609 = vor.u32 %v2605, %v2608
        %v2610 = vrot.slane %v2609, 4
        %v2612 = vshll.u32 %v2535, 16
        %v2614 = vrot.slane %v2612, 5
        %v2615 = vsel %vm661, %v2610, %v2614
        %v2617 = vshrl.u32 %v2536, 16
        %v2619 = vrot.slane %v2617, 4
        %v2620 = vshll.u32 %v2536, 16
        %v2622 = vrot.slane %v2620, 5
        %v2623 = vor.u32 %v2619, %v2622
        %v2624 = vrot.slane %v2623, 4
        %v2626 = vshll.u32 %v2537, 16
        %v2628 = vrot.slane %v2626, 5
        %v2629 = vsel %vm661, %v2624, %v2628
        %v2631 = vshrl.u32 %v2538, 16
        %v2633 = vrot.slane %v2631, 4
        %v2634 = vshll.u32 %v2538, 16
        %v2636 = vrot.slane %v2634, 5
        %v2637 = vor.u32 %v2633, %v2636
        %v2638 = vrot.slane %v2637, 4
        %v2640 = vshll.u32 %v2539, 16
        %v2642 = vrot.slane %v2640, 5
        %v2643 = vsel %vm661, %v2638, %v2642
        %v2645 = vshrl.u32 %v2540, 16
        %v2647 = vrot.slane %v2645, 4
        %v2648 = vshll.u32 %v2540, 16
        %v2650 = vrot.slane %v2648, 5
        %v2651 = vor.u32 %v2647, %v2650
        %v2652 = vrot.slane %v2651, 4
        %v2654 = vshll.u32 %v2541, 16
        %v2656 = vrot.slane %v2654, 5
        %v2657 = vsel %vm661, %v2652, %v2656
        %v2659 = vshrl.u32 %v2542, 16
        %v2661 = vrot.slane %v2659, 4
        %v2662 = vshll.u32 %v2542, 16
        %v2664 = vrot.slane %v2662, 5
        %v2665 = vor.u32 %v2661, %v2664
        %v2666 = vrot.slane %v2665, 4
        %v2668 = vshll.u32 %v2543, 16
        %v2670 = vrot.slane %v2668, 5
        %v2671 = vsel %vm661, %v2666, %v2670
        %v2673 = vshrl.u32 %v2544, 16
        %v2675 = vrot.slane %v2673, 4
        %v2676 = vshll.u32 %v2544, 16
        %v2678 = vrot.slane %v2676, 5
        %v2679 = vor.u32 %v2675, %v2678
        %v2680 = vrot.slane %v2679, 4
        %v2682 = vshll.u32 %v2545, 16
        %v2684 = vrot.slane %v2682, 5
        %v2685 = vsel %vm661, %v2680, %v2684
        %v2687 = vshrl.u32 %v2546, 16
        %v2689 = vrot.slane %v2687, 4
        %v2690 = vshll.u32 %v2546, 16
        %v2692 = vrot.slane %v2690, 5
        %v2693 = vor.u32 %v2689, %v2692
        %v2694 = vrot.slane %v2693, 4
        %v2696 = vshll.u32 %v2547, 16
        %v2698 = vrot.slane %v2696, 5
        %v2699 = vsel %vm661, %v2694, %v2698
        %v2701 = vshrl.u32 %v2548, 16
        %v2703 = vrot.slane %v2701, 4
        %v2704 = vshll.u32 %v2548, 16
        %v2706 = vrot.slane %v2704, 5
        %v2707 = vor.u32 %v2703, %v2706
        %v2708 = vrot.slane %v2707, 4
        %v2710 = vshll.u32 %v2549, 16
        %v2712 = vrot.slane %v2710, 5
        %v2713 = vsel %vm661, %v2708, %v2712
        %v2715 = vshrl.u32 %v2550, 16
        %v2717 = vrot.slane %v2715, 4
        %v2718 = vshll.u32 %v2550, 16
        %v2720 = vrot.slane %v2718, 5
        %v2721 = vor.u32 %v2717, %v2720
        %v2722 = vrot.slane %v2721, 4
        %v2724 = vshll.u32 %v2551, 16
        %v2726 = vrot.slane %v2724, 5
        %v2727 = vsel %vm661, %v2722, %v2726
        %v2729 = vshrl.u32 %v2552, 16
        %v2731 = vrot.slane %v2729, 4
        %v2732 = vshll.u32 %v2552, 16
        %v2734 = vrot.slane %v2732, 5
        %v2735 = vor.u32 %v2731, %v2734
        %v2736 = vrot.slane %v2735, 4
        %v2738 = vshll.u32 %v2553, 16
        %v2740 = vrot.slane %v2738, 5
        %v2741 = vsel %vm661, %v2736, %v2740
        %v2743 = vshrl.u32 %v2554, 16
        %v2745 = vrot.slane %v2743, 4
        %v2746 = vshll.u32 %v2554, 16
        %v2748 = vrot.slane %v2746, 5
        %v2749 = vor.u32 %v2745, %v2748
        %v2750 = vrot.slane %v2749, 4
        %v2752 = vshll.u32 %v2555, 16
        %v2754 = vrot.slane %v2752, 5
        %v2755 = vsel %vm661, %v2750, %v2754
        %v2757 = vshrl.u32 %v2556, 16
        %v2759 = vrot.slane %v2757, 4
        %v2760 = vshll.u32 %v2556, 16
        %v2762 = vrot.slane %v2760, 5
        %v2763 = vor.u32 %v2759, %v2762
        %v2764 = vrot.slane %v2763, 4
        %v2766 = vshll.u32 %v2557, 16
        %v2768 = vrot.slane %v2766, 5
        %v2769 = vsel %vm661, %v2764, %v2768
        %v2771 = vshrl.u32 %v2558, 16
        %v2773 = vrot.slane %v2771, 4
        %v2774 = vshll.u32 %v2558, 16
        %v2776 = vrot.slane %v2774, 5
        %v2777 = vor.u32 %v2773, %v2776
        %v2778 = vrot.slane %v2777, 4
        %v2780 = vshll.u32 %v2559, 16
        %v2782 = vrot.slane %v2780, 5
        %v2783 = vsel %vm661, %v2778, %v2782
        %v2784 = vld [vmem:[%s1 + $0x200] sm:$0xf]
        %v2785 = vld [vmem:[%s1 + $0x204] sm:$0xf]
        %v2786 = vld [vmem:[%s1 + $0x208] sm:$0xf]
        %v2787 = vld [vmem:[%s1 + $0x20c] sm:$0xf]
        %v2788 = vld [vmem:[%s1 + $0x210] sm:$0xf]
        %v2789 = vld [vmem:[%s1 + $0x214] sm:$0xf]
        %v2790 = vld [vmem:[%s1 + $0x218] sm:$0xf]
        %v2791 = vld [vmem:[%s1 + $0x21c] sm:$0xf]
        %v2792 = vld [vmem:[%s1 + $0x220] sm:$0xf]
        %v2793 = vld [vmem:[%s1 + $0x224] sm:$0xf]
        %v2794 = vld [vmem:[%s1 + $0x228] sm:$0xf]
        %v2795 = vld [vmem:[%s1 + $0x22c] sm:$0xf]
        %v2796 = vld [vmem:[%s1 + $0x230] sm:$0xf]
        %v2797 = vld [vmem:[%s1 + $0x234] sm:$0xf]
        %v2798 = vld [vmem:[%s1 + $0x238] sm:$0xf]
        %v2799 = vld [vmem:[%s1 + $0x23c] sm:$0xf]
        %v2800 = vunpack.c.l.b16 %v2573
        %v2801 = vunpack.c.l.b16 %v2587
        %v2802 = vunpack.c.l.b16 %v2601
        %v2803 = vunpack.c.l.b16 %v2615
        %v2804 = vunpack.c.l.b16 %v2629
        %v2805 = vunpack.c.l.b16 %v2643
        %v2806 = vunpack.c.l.b16 %v2657
        %v2807 = vunpack.c.l.b16 %v2671
        %v2808 = vunpack.c.l.b16 %v2685
        %v2809 = vunpack.c.l.b16 %v2699
        %v2810 = vunpack.c.l.b16 %v2713
        %v2811 = vunpack.c.l.b16 %v2727
        %v2812 = vunpack.c.l.b16 %v2741
        %v2813 = vunpack.c.l.b16 %v2755
        %v2814 = vunpack.c.l.b16 %v2769
        %v2815 = vunpack.c.l.b16 %v2783
        %v2816 = vpack.c.b16 %v2801, %v2800
        %v2817 = vpack.c.b16 %v2803, %v2802
        %v2818 = vpack.c.b16 %v2805, %v2804
        %v2819 = vpack.c.b16 %v2807, %v2806
        %v2820 = vpack.c.b16 %v2809, %v2808
        %v2821 = vpack.c.b16 %v2811, %v2810
        %v2822 = vpack.c.b16 %v2813, %v2812
        %v2823 = vpack.c.b16 %v2815, %v2814
        %v2848 = vunpack.c.l.b16 %v2784
        %v2849 = vunpack.c.l.b16 %v2785
        %v2850 = vunpack.c.l.b16 %v2786
        %v2851 = vunpack.c.l.b16 %v2787
        %v2852 = vunpack.c.l.b16 %v2788
        %v2853 = vunpack.c.l.b16 %v2789
        %v2854 = vunpack.c.l.b16 %v2790
        %v2855 = vunpack.c.l.b16 %v2791
        %v2856 = vunpack.c.l.b16 %v2792
        %v2857 = vunpack.c.l.b16 %v2793
        %v2858 = vunpack.c.l.b16 %v2794
        %v2859 = vunpack.c.l.b16 %v2795
        %v2860 = vunpack.c.l.b16 %v2796
        %v2861 = vunpack.c.l.b16 %v2797
        %v2862 = vunpack.c.l.b16 %v2798
        %v2863 = vunpack.c.l.b16 %v2799
        %v2864 = vpack.c.b16 %v2849, %v2848
        %v2865 = vpack.c.b16 %v2851, %v2850
        %v2866 = vpack.c.b16 %v2853, %v2852
        %v2867 = vpack.c.b16 %v2855, %v2854
        %v2868 = vpack.c.b16 %v2857, %v2856
        %v2869 = vpack.c.b16 %v2859, %v2858
        %v2870 = vpack.c.b16 %v2861, %v2860
        %v2871 = vpack.c.b16 %v2863, %v2862
        %2880 = vmatprep.subr.bf16.mxu0 0
        %2881 = vmatpush1.bf16.msra.mxu0 %v2864
        %2882 = vmatprep.subr.bf16.mxu0 0
        %2883 = vmatpush1.bf16.msra.mxu0 %v2865
        %2884 = vmatprep.subr.bf16.mxu0 0
        %2885 = vmatpush1.bf16.msra.mxu0 %v2866
        %2886 = vmatprep.subr.bf16.mxu0 0
        %2887 = vmatpush1.bf16.msra.mxu0 %v2867
        %2888 = vmatprep.subr.bf16.mxu0 0
        %2889 = vmatpush1.bf16.msra.mxu0 %v2868
        %2890 = vmatprep.subr.bf16.mxu0 0
        %2891 = vmatpush1.bf16.msra.mxu0 %v2869
        %2892 = vmatprep.subr.bf16.mxu0 0
        %2893 = vmatpush1.bf16.msra.mxu0 %v2870
        %2894 = vmatprep.subr.bf16.mxu0 0
        %2895 = vmatpush1.bf16.msra.mxu0 %v2871
        %2896 = vmatprep.subr.bf16.mxu0 0
        %2897 = vmatpush1.bf16.msra.mxu0 0
        %2898 = vmatprep.subr.bf16.mxu0 0
        %2899 = vmatpush1.bf16.msra.mxu0 0
        %2900 = vmatprep.subr.bf16.mxu0 0
        %2901 = vmatpush1.bf16.msra.mxu0 0
        %2902 = vmatprep.subr.bf16.mxu0 0
        %2903 = vmatpush1.bf16.msra.mxu0 0
        %2904 = vmatprep.subr.bf16.mxu0 0
        %2905 = vmatpush1.bf16.msra.mxu0 0
        %2906 = vmatprep.subr.bf16.mxu0 0
        %2907 = vmatpush1.bf16.msra.mxu0 0
        %2908 = vmatprep.subr.bf16.mxu0 0
        %2909 = vmatpush1.bf16.msra.mxu0 0
        %2910 = vmatprep.subr.bf16.mxu0 0
        %2911 = vmatpush1.bf16.msra.mxu0 0
        %2912 = vmatprep.mubr.bf16.mxu0 0
        %2913 = vmatmul.mubr.bf16.gmra.mrb[0].mxu0 %v2816
        %v2914 = vpop.f32.mrb[0].mxu0
        %v2915 = vadd.f32 0.0, %v2914
        %v2916 = vpop.f32.mrb[0].mxu0
        %v2917 = vpop.f32.mrb[0].mxu0
        %v2918 = vadd.f32 0.0, %v2917
        %v2919 = vpop.f32.mrb[0].mxu0
        %2920 = vmatprep.mubr.bf16.mxu0 0
        %2921 = vmatmul.mubr.bf16.gmra.mrb[0].mxu0 %v2817
        %v2922 = vpop.f32.mrb[0].mxu0
        %v2923 = vadd.f32 0.0, %v2922
        %v2924 = vpop.f32.mrb[0].mxu0
        %v2925 = vpop.f32.mrb[0].mxu0
        %v2926 = vadd.f32 0.0, %v2925
        %v2927 = vpop.f32.mrb[0].mxu0
        %2928 = vmatprep.mubr.bf16.mxu0 0
        %2929 = vmatmul.mubr.bf16.gmra.mrb[0].mxu0 %v2818
        %v2930 = vpop.f32.mrb[0].mxu0
        %v2931 = vadd.f32 0.0, %v2930
        %v2932 = vpop.f32.mrb[0].mxu0
        %v2933 = vpop.f32.mrb[0].mxu0
        %v2934 = vadd.f32 0.0, %v2933
        %v2935 = vpop.f32.mrb[0].mxu0
        %2936 = vmatprep.mubr.bf16.mxu0 0
        %2937 = vmatmul.mubr.bf16.gmra.mrb[0].mxu0 %v2819
        %v2938 = vpop.f32.mrb[0].mxu0
        %v2939 = vadd.f32 0.0, %v2938
        %v2940 = vpop.f32.mrb[0].mxu0
        %v2941 = vpop.f32.mrb[0].mxu0
        %v2942 = vadd.f32 0.0, %v2941
        %v2943 = vpop.f32.mrb[0].mxu0
        %2944 = vmatprep.mubr.bf16.mxu0 0
        %2945 = vmatmul.mubr.bf16.gmra.mrb[0].mxu0 %v2820
        %v2946 = vpop.f32.mrb[0].mxu0
        %v2947 = vadd.f32 0.0, %v2946
        %v2948 = vpop.f32.mrb[0].mxu0
        %v2949 = vpop.f32.mrb[0].mxu0
        %v2950 = vadd.f32 0.0, %v2949
        %v2951 = vpop.f32.mrb[0].mxu0
        %2952 = vmatprep.mubr.bf16.mxu0 0
        %2953 = vmatmul.mubr.bf16.gmra.mrb[0].mxu0 %v2821
        %v2954 = vpop.f32.mrb[0].mxu0
        %v2955 = vadd.f32 0.0, %v2954
        %v2956 = vpop.f32.mrb[0].mxu0
        %v2957 = vpop.f32.mrb[0].mxu0
        %v2958 = vadd.f32 0.0, %v2957
        %v2959 = vpop.f32.mrb[0].mxu0
        %2960 = vmatprep.mubr.bf16.mxu0 0
        %2961 = vmatmul.mubr.bf16.gmra.mrb[0].mxu0 %v2822
        %v2962 = vpop.f32.mrb[0].mxu0
        %v2963 = vadd.f32 0.0, %v2962
        %v2964 = vpop.f32.mrb[0].mxu0
        %v2965 = vpop.f32.mrb[0].mxu0
        %v2966 = vadd.f32 0.0, %v2965
        %v2967 = vpop.f32.mrb[0].mxu0
        %2968 = vmatprep.mubr.bf16.mxu0 0
        %2969 = vmatmul.mubr.bf16.gmra.mrb[0].mxu0 %v2823
        %v2970 = vpop.f32.mrb[0].mxu0
        %v2971 = vadd.f32 0.0, %v2970
        %v2972 = vpop.f32.mrb[0].mxu0
        %v2973 = vpop.f32.mrb[0].mxu0
        %v2974 = vadd.f32 0.0, %v2973
        %v2975 = vpop.f32.mrb[0].mxu0
        %2976 = vdwg.mxu0
        %v2977 = vadd.f32 %v2512, %v2915
        %v2978 = vadd.f32 %v2513, %v2918
        %v2979 = vadd.f32 %v2514, %v2923
        %v2980 = vadd.f32 %v2515, %v2926
        %v2981 = vadd.f32 %v2516, %v2931
        %v2982 = vadd.f32 %v2517, %v2934
        %v2983 = vadd.f32 %v2518, %v2939
        %v2984 = vadd.f32 %v2519, %v2942
        %v2985 = vadd.f32 %v2520, %v2947
        %v2986 = vadd.f32 %v2521, %v2950
        %v2987 = vadd.f32 %v2522, %v2955
        %v2988 = vadd.f32 %v2523, %v2958
        %v2989 = vadd.f32 %v2524, %v2963
        %v2990 = vadd.f32 %v2525, %v2966
        %v2991 = vadd.f32 %v2526, %v2971
        %v2992 = vadd.f32 %v2527, %v2974
        %v2993 = vld [vmem:[%s2] sm:$0x1]
        %v2995 = vlaneseq
        %v2996 = vshrl.u32 %v2995, 7
        %v2997 = vsub.s32 0, %v2996
        %v2998 = vrot.slane %v2993, %v2997
        %v3000 = vadd.f32 %v2977, %v2998
        %v3001 = vadd.f32 %v2978, %v2998
        %v3002 = vadd.f32 %v2979, %v2998
        %v3003 = vadd.f32 %v2980, %v2998
        %v3004 = vadd.f32 %v2981, %v2998
        %v3005 = vadd.f32 %v2982, %v2998
        %v3006 = vadd.f32 %v2983, %v2998
        %v3007 = vadd.f32 %v2984, %v2998
        %v3008 = vadd.f32 %v2985, %v2998
        %v3009 = vadd.f32 %v2986, %v2998
        %v3010 = vadd.f32 %v2987, %v2998
        %v3011 = vadd.f32 %v2988, %v2998
        %v3012 = vadd.f32 %v2989, %v2998
        %v3013 = vadd.f32 %v2990, %v2998
        %v3014 = vadd.f32 %v2991, %v2998
        %v3015 = vadd.f32 %v2992, %v2998
        %3016 = vst [vmem:[%s166] sm:$0xff] %v3000
        %3017 = vst [vmem:[%s166 + $0x8] sm:$0xff] %v3001
        %3018 = vst [vmem:[%s166 + $0x10] sm:$0xff] %v3002
        %3019 = vst [vmem:[%s166 + $0x18] sm:$0xff] %v3003
        %3020 = vst [vmem:[%s166 + $0x20] sm:$0xff] %v3004
        %3021 = vst [vmem:[%s166 + $0x28] sm:$0xff] %v3005
        %3022 = vst [vmem:[%s166 + $0x30] sm:$0xff] %v3006
        %3023 = vst [vmem:[%s166 + $0x38] sm:$0xff] %v3007
        %3024 = vst [vmem:[%s166 + $0x40] sm:$0xff] %v3008
        %3025 = vst [vmem:[%s166 + $0x48] sm:$0xff] %v3009
        %3026 = vst [vmem:[%s166 + $0x50] sm:$0xff] %v3010
        %3027 = vst [vmem:[%s166 + $0x58] sm:$0xff] %v3011
        %3028 = vst [vmem:[%s166 + $0x60] sm:$0xff] %v3012
        %3029 = vst [vmem:[%s166 + $0x68] sm:$0xff] %v3013
        %3030 = vst [vmem:[%s166 + $0x70] sm:$0xff] %v3014
        %3031 = vst [vmem:[%s166 + $0x78] sm:$0xff] %v3015
        %s3032 = sand.u32 %s93, 1
        %s3033 = scalar_lea.sflag [#allocation3], %s3032
        %s3034 = sand.u32 %s93, 1
        %s3035 = smul.addr %s3034, 128
        %s3036 = scalar_lea.vmem [#allocation2], %s3035
        // Predicated region
        $region33: #{downsample_block.1} parent=31 // pred_check
          %p3037 = pneg %p103
        $region34: #{downsample_block.1} parent=31 // pred_check_branch
          %3039 = sbr.rel (%p3037) target = $region36
        $region35: #{downsample_block.1} parent=31 // pred_region
          %s3040 = smul.u32 2, %s17
          %s3042 = ssub.s32 2048, 2048
          %3043 = vsyncadd %s3033, %s3042
          %s3044 = smul.addr %s3040, 8
          %s3045 = smul.addr %s3044, 128
          %s3046 = scalar_lea.hbm %s3, %s3045
          %s3047 = sshll.u32 %s3036, 4
          %s3048 = int_to_ptr.vmem [resolvable:$true] %s3047
          %3053 = dma.vmem_to_hbm [thread:$0]  %s3048, 2048, %s3046, %s3033, 128, 128, 8
        $region36: #{downsample_block.1} parent=31 // pred_fallthru
          _
      $region32: #{downsample_block.1} parent=5 // pred_fallthru
        _
      %p3054 = scmp.le.s32.totalorder 2, %s12
      // Predicated region
      $region37: #{downsample_block.1} parent=5 // pred_check
        %p3055 = pneg %p3054
      $region38: #{downsample_block.1} parent=5 // pred_check_branch
        %3057 = sbr.rel (%p3055) target = $region40
      $region39: #{downsample_block.1} parent=5 // pred_region
        %s3058 = ssub.s32 %s12, 2
        // Predicated region
        $region41: #{downsample_block.1} parent=39 // pred_check
          %p3059 = pneg %p109
        $region42: #{downsample_block.1} parent=39 // pred_check_branch
          %3061 = sbr.rel (%p3059) target = $region44
        $region43: #{downsample_block.1} parent=39 // pred_region
          %s3062 = sand.u32 %s94, 1
          %s3063 = scalar_lea.sflag [#allocation3], %s3062
          %s3064 = sand.u32 %s94, 1
          %s3065 = smul.addr %s3064, 128
          %s3066 = scalar_lea.vmem [#allocation2], %s3065
          %3067 = dma.done %s3063, 2048
        $region44: #{downsample_block.1} parent=39 // pred_fallthru
          _
      $region40: #{downsample_block.1} parent=5 // pred_fallthru
        _
    $region6: #{downsample_block.1} parent=1 // loop_footer
      %s16 = sadd.s32 1, %s12
    $region7: #{downsample_block.1} parent=1 // loop_footer_branch
      %11 = sbr.rel target = $region3
    $region8: #{downsample_block.1} parent=1 // loop_exit
      _
    %3068 = vsyncpa [#allocation3], 1
    %s3069 = scalar_lea.sflag [#allocation3], 1
    %3070 = vsyncpa %s3069, 1

</llo_original>
